<compile_context>
chip_gen: v6e
topology: v6e:2x2x1
jax: 0.10.0
libtpu: 0.0.40
codegen_flags: <defaults>
</compile_context>

<pallas_src>
import functools
import math

import jax
import jax.numpy as jnp
from jax.experimental import pallas as pl
from jax.experimental.pallas import tpu as pltpu

# ------------------------------ config (small, synthetic) -------------------
BATCH = 2
SEQ = 8
HIDDEN = 32
NUM_HEADS = 2
HEAD_DIM = HIDDEN // NUM_HEADS
FFN = 64
NUM_LAYERS = 2
VOCAB = 50
PAD_IDX = 0
LN_EPS = 1e-12  # BERT layernorm eps

# Packed per-layer vector table layout (rows of the (L, N_VEC, VEC_W) array).
_ROW_B_QKV, _ROW_B_O, _ROW_LN1_G, _ROW_LN1_B = 0, 1, 2, 3
_ROW_B1, _ROW_B2, _ROW_LN2_G, _ROW_LN2_B = 4, 5, 6, 7
N_VEC = 8
VEC_W = max(3 * HIDDEN, FFN)


# ------------------------------ shared math ---------------------------------
def _layernorm(x, g, b):
    mu = jnp.mean(x, axis=-1, keepdims=True)
    var = jnp.mean((x - mu) ** 2, axis=-1, keepdims=True)
    return (x - mu) * jax.lax.rsqrt(var + LN_EPS) * g + b


# ------------------------------ fused encoder kernel ------------------------
def _bert_stack_kernel(
    x_ref, neg_ref, embln_ref,
    wqkv_ref, wo_ref, w1_ref, w2_ref, vec_ref,
    out_ref,
    h_ref,
    *, batch, seq, num_heads, head_dim, hidden, ffn,
):
    """One grid step = one layer over the WHOLE batch.

    The hidden state (batch*seq, hidden) is carried across layers in h_ref
    (VMEM scratch).  Valid only because the layer axis is the single,
    sequentially iterated 'arbitrary' grid axis.
    """
    l = pl.program_id(0)
    n_layers = pl.num_programs(0)

    # Layer 0: embedding LayerNorm, park the hidden state in VMEM scratch.
    @pl.when(l == 0)
    def _():
        x = x_ref[...].reshape(batch * seq, hidden)           # leading-dim merge
        h_ref[...] = _layernorm(x, embln_ref[0:1, :], embln_ref[1:2, :])

    h = h_ref[...]                                            # (B*S, H) f32
    hb = h.astype(jnp.bfloat16)

    # Unpack the per-layer small-vector table once (static lane/sublane slices).
    vec = vec_ref[0]                                          # (N_VEC, VEC_W) f32
    b_qkv = vec[_ROW_B_QKV:_ROW_B_QKV + 1, 0:3 * hidden]      # (1, 3H)
    b_o = vec[_ROW_B_O:_ROW_B_O + 1, 0:hidden]
    ln1_g = vec[_ROW_LN1_G:_ROW_LN1_G + 1, 0:hidden]
    ln1_b = vec[_ROW_LN1_B:_ROW_LN1_B + 1, 0:hidden]
    b1 = vec[_ROW_B1:_ROW_B1 + 1, 0:ffn]
    b2 = vec[_ROW_B2:_ROW_B2 + 1, 0:hidden]
    ln2_g = vec[_ROW_LN2_G:_ROW_LN2_G + 1, 0:hidden]
    ln2_b = vec[_ROW_LN2_B:_ROW_LN2_B + 1, 0:hidden]

    # ---- fused QKV projection: ONE lane-dense 2-D MXU contraction -----------
    # (1/sqrt(head_dim) is already folded into the Q columns of w_qkv / b_qkv.)
    qkv = jnp.dot(hb, wqkv_ref[0],
                  preferred_element_type=jnp.float32) + b_qkv  # (B*S, 3H)
    qkv3 = qkv.reshape(batch, seq, 3 * hidden)                 # leading-dim split
    neg = neg_ref[...]                                         # (B, 1, S) additive key mask

    # ---- attention: per-head S x S work (inherently per-head), batched over B
    # nh is tiny (2); the loop is unrolled at trace time and only covers the
    # matmuls that cannot be merged anyway.  No 4-D transposes.
    ctx_heads = []
    for n in range(num_heads):
        q_n = qkv3[:, :, n * head_dim:(n + 1) * head_dim].astype(jnp.bfloat16)
        k_n = qkv3[:, :, hidden + n * head_dim:
                   hidden + (n + 1) * head_dim].astype(jnp.bfloat16)
        v_n = qkv3[:, :, 2 * hidden + n * head_dim:
                   2 * hidden + (n + 1) * head_dim].astype(jnp.bfloat16)
        s = jnp.einsum('bqd,bkd->bqk', q_n, k_n,
                       preferred_element_type=jnp.float32)     # (B, S, S)
        s = s + neg
        s = s - jnp.max(s, axis=-1, keepdims=True)
        p = jnp.exp(s)
        p = p * pl.reciprocal(jnp.sum(p, axis=-1, keepdims=True), approx=True)
        ctx_heads.append(
            jnp.einsum('bqk,bkd->bqd', p.astype(jnp.bfloat16), v_n,
                       preferred_element_type=jnp.float32))    # (B, S, hd)

    # ---- output projection with the head-sum folded into one MXU contraction
    ctx = jnp.concatenate(ctx_heads, axis=-1)                  # (B, S, H)
    ctx2d = ctx.reshape(batch * seq, hidden).astype(jnp.bfloat16)
    attn = jnp.dot(ctx2d, wo_ref[0],
                   preferred_element_type=jnp.float32) + b_o   # (B*S, H)

    # ---- post-LN residual block 1 -------------------------------------------
    h1 = _layernorm(h + attn, ln1_g, ln1_b)

    # ---- feed-forward --------------------------------------------------------
    ff = jnp.dot(h1.astype(jnp.bfloat16), w1_ref[0],
                 preferred_element_type=jnp.float32) + b1
    # TODO(synk): HF/PyTorch BERT default intermediate act is exact (erf) GELU;
    # tanh approximation is used here for guaranteed Mosaic lowering.
    ff = jax.nn.gelu(ff, approximate=True)
    ff = jnp.dot(ff.astype(jnp.bfloat16), w2_ref[0],
                 preferred_element_type=jnp.float32) + b2

    # ---- post-LN residual block 2, carry to next layer -----------------------
    h2 = _layernorm(h1 + ff, ln2_g, ln2_b)
    h_ref[...] = h2

    # Only the B CLS rows of the final layer ever leave VMEM (one slab write).
    @pl.when(l == n_layers - 1)
    def _():
        out_ref[...] = h2.reshape(batch, seq, hidden)[:, 0:1, :]   # (B, 1, H)


def bert_encoder_stack(x_emb, neg_mask, params):
    """x_emb: (B, S, H) f32 embeddings (pre-LN); neg_mask: (B, 1, S) additive
    key mask (0 for real tokens, -1e9 for pads).  Returns CLS memory (B, H)."""
    B, S, H = x_emb.shape
    L = params['w_qkv'].shape[0]
    nh = NUM_HEADS
    hd = H // nh
    F = params['w1'].shape[-1]

    kern = functools.partial(_bert_stack_kernel, batch=B, seq=S,
                             num_heads=nh, head_dim=hd, hidden=H, ffn=F)

    # NOTE: the single grid axis is the layer axis and MUST stay sequential
    # ('arbitrary') — the hidden state carried in VMEM scratch depends on it.
    grid_spec = pltpu.PrefetchScalarGridSpec(
        num_scalar_prefetch=0,
        grid=(L,),
        in_specs=[
            pl.BlockSpec((B, S, H), lambda l: (0, 0, 0)),          # embeddings (full batch)
            pl.BlockSpec((B, 1, S), lambda l: (0, 0, 0)),          # additive key mask
            pl.BlockSpec((2, H), lambda l: (0, 0)),                # emb LN gamma/beta packed
            pl.BlockSpec((1, H, 3 * H), lambda l: (l, 0, 0)),      # w_qkv  (L, H, 3H)
            pl.BlockSpec((1, H, H), lambda l: (l, 0, 0)),          # w_o    (L, H, H)
            pl.BlockSpec((1, H, F), lambda l: (l, 0, 0)),          # w1     (L, H, F)
            pl.BlockSpec((1, F, H), lambda l: (l, 0, 0)),          # w2     (L, F, H)
            pl.BlockSpec((1, N_VEC, VEC_W), lambda l: (l, 0, 0)),  # packed small vectors
        ],
        out_specs=pl.BlockSpec((B, 1, H), lambda l: (0, 0, 0)),    # all CLS rows, one slab
        scratch_shapes=[pltpu.VMEM((B * S, H), jnp.float32)],      # resident hidden state
    )

    # Advisory cost estimate so XLA schedules the surrounding gather/mask well.
    per_layer_flops = (2 * B * S * H * 3 * H          # QKV projection
                       + 2 * (2 * B * nh * S * S * hd)  # scores + ctx
                       + 2 * B * S * H * H            # output projection
                       + 2 * (2 * B * S * H * F))     # FFN up + down
    per_layer_trans = B * nh * S * S + B * S * F + B * nh * S + 2 * B * S
    in_arrays = (x_emb, neg_mask, params['emb_ln'], params['w_qkv'],
                 params['w_o'], params['w1'], params['w2'], params['layer_vecs'])
    bytes_accessed = sum(int(a.size) * a.dtype.itemsize for a in in_arrays) \
        + B * 1 * H * 4
    cost = pl.CostEstimate(flops=L * per_layer_flops,
                           transcendentals=L * per_layer_trans,
                           bytes_accessed=bytes_accessed)

    out = pl.pallas_call(
        kern,
        out_shape=jax.ShapeDtypeStruct((B, 1, H), jnp.float32),
        grid_spec=grid_spec,
        compiler_params=pltpu.CompilerParams(
            dimension_semantics=("arbitrary",),
            # Tiny here; at real BERT dims (H=768, F=3072) per-layer bf16
            # weights ~14 MB double-buffer to ~28 MB -> must be raised/tiled
            # explicitly (v7x physical VMEM is only 64 MiB).
            vmem_limit_bytes=32 * 1024 * 1024),
        cost_estimate=cost,
    )(x_emb, neg_mask,
      params['emb_ln'],
      params['w_qkv'], params['w_o'], params['w1'], params['w2'],
      params['layer_vecs'])
    return out[:, 0, :]


# ------------------------------ parameters ----------------------------------
def init_params(key):
    def nrm(k, shape, std=0.02):
        return jax.random.normal(k, shape, jnp.float32) * std

    keys = jax.random.split(key, 4 + NUM_LAYERS)
    params = {
        'tok_emb': nrm(keys[0], (VOCAB, HIDDEN)),
        'pos_emb': nrm(keys[1], (SEQ, HIDDEN)),
        'typ_emb': nrm(keys[2], (2, HIDDEN)),
        # Embedding LayerNorm gamma (row 0) / beta (row 1), packed.
        'emb_ln': jnp.stack([jnp.ones((HIDDEN,), jnp.float32),
                             jnp.zeros((HIDDEN,), jnp.float32)]),
    }

    scale = 1.0 / math.sqrt(HEAD_DIM)

    def pad_row(v):
        return jnp.pad(v, (0, VEC_W - v.shape[0]))

    w_qkv, w_o, w1, w2, layer_vecs = [], [], [], [], []
    for li in range(NUM_LAYERS):
        lk = jax.random.split(keys[4 + li], 16)
        wq = nrm(lk[0], (HIDDEN, HIDDEN))
        wk = nrm(lk[1], (HIDDEN, HIDDEN))
        wv = nrm(lk[2], (HIDDEN, HIDDEN))
        wo = nrm(lk[3], (HIDDEN, HIDDEN))
        bq = nrm(lk[4], (HIDDEN,))
        bk = nrm(lk[5], (HIDDEN,))
        bv = nrm(lk[6], (HIDDEN,))
        bo = nrm(lk[7], (HIDDEN,))
        # Fold 1/sqrt(head_dim) into the Q weights/bias (one-time, exact).
        w_qkv.append(jnp.concatenate([wq * scale, wk, wv], axis=1))   # (H, 3H)
        b_qkv_l = jnp.concatenate([bq * scale, bk, bv], axis=0)       # (3H,)
        w_o.append(wo)                                                # (H, H)
        ln1_g = 1.0 + nrm(lk[8], (HIDDEN,), 0.1)
        ln1_b = nrm(lk[9], (HIDDEN,), 0.1)
        w1.append(nrm(lk[10], (HIDDEN, FFN)))
        b1_l = nrm(lk[11], (FFN,))
        w2.append(nrm(lk[12], (FFN, HIDDEN)))
        b2_l = nrm(lk[13], (HIDDEN,))
        ln2_g = 1.0 + nrm(lk[14], (HIDDEN,), 0.1)
        ln2_b = nrm(lk[15], (HIDDEN,), 0.1)
        # Pack the ten tiny per-layer vectors into one (N_VEC, VEC_W) table.
        layer_vecs.append(jnp.stack([
            pad_row(b_qkv_l),   # _ROW_B_QKV
            pad_row(bo),        # _ROW_B_O
            pad_row(ln1_g),     # _ROW_LN1_G
            pad_row(ln1_b),     # _ROW_LN1_B
            pad_row(b1_l),      # _ROW_B1
            pad_row(b2_l),      # _ROW_B2
            pad_row(ln2_g),     # _ROW_LN2_G
            pad_row(ln2_b),     # _ROW_LN2_B
        ]))

    # Matmul operands stored bf16 (MXU inputs); packed vectors / LN stay f32.
    params.update({
        'w_qkv': jnp.stack(w_qkv).astype(jnp.bfloat16),   # (L, H, 3H)
        'w_o': jnp.stack(w_o).astype(jnp.bfloat16),       # (L, H, H)
        'w1': jnp.stack(w1).astype(jnp.bfloat16),         # (L, H, F)
        'w2': jnp.stack(w2).astype(jnp.bfloat16),         # (L, F, H)
        'layer_vecs': jnp.stack(layer_vecs),              # (L, 8, VEC_W)
    })
    return params


# ------------------------------ forward (Bert_Entail_CLS) -------------------
def bert_entail_cls_forward(inputs, params):
    """inputs: int32 (B, S) token ids.  Returns {'output_memory': (B, H)}."""
    B, S = inputs.shape
    # src_nopad_mask = inputs != pad_idx, used as key-side attention mask.
    neg_mask = jnp.where(inputs == PAD_IDX, -1e9, 0.0).astype(jnp.float32)
    neg_mask = neg_mask[:, None, :]                       # (B, 1, S)

    # Embeddings (gather is plain-JAX glue); LayerNorm happens inside the kernel.
    tok = jnp.take(params['tok_emb'], inputs, axis=0)     # (B, S, H)
    pos = params['pos_emb'][None, :S, :]
    typ = params['typ_emb'][0][None, None, :]
    emb = tok + pos + typ

    memory = bert_encoder_stack(emb, neg_mask, params)    # (B, H)  CLS rows
    return {'output_memory': memory}


# ------------------------------ pure-JAX reference --------------------------
def bert_entail_cls_reference(inputs, params):
    B, S = inputs.shape
    H, nh, hd = HIDDEN, NUM_HEADS, HEAD_DIM
    neg = jnp.where(inputs == PAD_IDX, -1e9, 0.0).astype(jnp.float32)
    neg = neg[:, None, None, :]                           # (B, 1, 1, S)
    tok = jnp.take(params['tok_emb'], inputs, axis=0)
    emb = tok + params['pos_emb'][None, :S, :] + params['typ_emb'][0][None, None, :]
    h = _layernorm(emb, params['emb_ln'][0], params['emb_ln'][1])
    L = params['w_qkv'].shape[0]
    for l in range(L):
        wqkv = params['w_qkv'][l].astype(jnp.float32)     # (H, 3H), scale folded
        vec = params['layer_vecs'][l]
        b_qkv = vec[_ROW_B_QKV, 0:3 * H]
        b_o = vec[_ROW_B_O, 0:H]
        ln1_g, ln1_b = vec[_ROW_LN1_G, 0:H], vec[_ROW_LN1_B, 0:H]
        b1, b2 = vec[_ROW_B1, 0:FFN], vec[_ROW_B2, 0:H]
        ln2_g, ln2_b = vec[_ROW_LN2_G, 0:H], vec[_ROW_LN2_B, 0:H]

        qkv = h @ wqkv + b_qkv                            # (B, S, 3H)
        q = qkv[..., 0:H].reshape(B, S, nh, hd)
        k = qkv[..., H:2 * H].reshape(B, S, nh, hd)
        v = qkv[..., 2 * H:3 * H].reshape(B, S, nh, hd)
        s = jnp.einsum('bqnd,bknd->bnqk', q, k) + neg
        p = jax.nn.softmax(s, axis=-1)
        ctx = jnp.einsum('bnqk,bknd->bqnd', p, v).reshape(B, S, H)
        attn = ctx @ params['w_o'][l].astype(jnp.float32) + b_o
        h1 = _layernorm(h + attn, ln1_g, ln1_b)
        ff = h1 @ params['w1'][l].astype(jnp.float32) + b1
        ff = jax.nn.gelu(ff, approximate=True)
        ff = ff @ params['w2'][l].astype(jnp.float32) + b2
        h = _layernorm(h1 + ff, ln2_g, ln2_b)
    return h[:, 0, :]


# ------------------------------ main -----------------------------------------
if __name__ == "__main__":
    key = jax.random.PRNGKey(0)
    pkey, dkey = jax.random.split(key)
    params = init_params(pkey)

    # Deterministic token ids in [1, VOCAB), then pad the tail of row 1.
    inputs = jax.random.randint(dkey, (BATCH, SEQ), 1, VOCAB, dtype=jnp.int32)
    inputs = inputs.at[1, -3:].set(PAD_IDX)

    fwd = jax.jit(bert_entail_cls_forward)
    out = fwd(inputs, params)
    mem = jax.block_until_ready(out['output_memory'])

    assert mem.shape == (BATCH, HIDDEN) and mem.dtype == jnp.float32
    assert bool(jnp.all(jnp.isfinite(mem)))

    ref = bert_entail_cls_reference(inputs, params)
    max_err = float(jnp.max(jnp.abs(mem - ref)))
    assert max_err < 1e-1, f"mismatch vs reference: max abs err {max_err}"

    print("KERNEL_OK")
</pallas_src>

<mosaic_0001>
module attributes {stable_mosaic.version = 11 : i64} {
  func.func @_bert_stack_kernel(%arg0: i32, %arg1: memref<2x8x32xf32, #tpu.memory_space<vmem>>, %arg2: memref<2x1x8xf32, #tpu.memory_space<vmem>>, %arg3: memref<2x32xf32, #tpu.memory_space<vmem>>, %arg4: memref<1x32x96xbf16, #tpu.memory_space<vmem>>, %arg5: memref<1x32x32xbf16, #tpu.memory_space<vmem>>, %arg6: memref<1x32x64xbf16, #tpu.memory_space<vmem>>, %arg7: memref<1x64x32xbf16, #tpu.memory_space<vmem>>, %arg8: memref<1x8x96xf32, #tpu.memory_space<vmem>>, %arg9: memref<2x1x32xf32, #tpu.memory_space<vmem>>, %arg10: memref<16x32xf32, #tpu.memory_space<vmem>>) attributes {dimension_semantics = [#tpu.dimension_semantics<arbitrary>], iteration_bounds = array<i64: 2>, scalar_prefetch = 0 : i64, scratch_operands = 1 : i64, tpu.core_type = #tpu.core_type<tc>, window_params = [{pipeline_mode = #tpu.pipeline_mode<synchronous>, transform_indices = @transform_0, window_bounds = array<i64: 2, 8, 32>}, {pipeline_mode = #tpu.pipeline_mode<synchronous>, transform_indices = @transform_1, window_bounds = array<i64: 2, 1, 8>}, {pipeline_mode = #tpu.pipeline_mode<synchronous>, transform_indices = @transform_2, window_bounds = array<i64: 2, 32>}, {transform_indices = @transform_3, window_bounds = array<i64: 1, 32, 96>}, {transform_indices = @transform_4, window_bounds = array<i64: 1, 32, 32>}, {transform_indices = @transform_5, window_bounds = array<i64: 1, 32, 64>}, {transform_indices = @transform_6, window_bounds = array<i64: 1, 64, 32>}, {transform_indices = @transform_7, window_bounds = array<i64: 1, 8, 96>}, {pipeline_mode = #tpu.pipeline_mode<synchronous>, transform_indices = @transform_8, window_bounds = array<i64: 2, 1, 32>}]} {
    %c0_i32 = arith.constant 0 : i32
    %0 = arith.cmpi eq, %arg0, %c0_i32 : i32
    %1 = arith.extui %0 : i1 to i32
    %c0_i32_0 = arith.constant 0 : i32
    %2 = arith.cmpi ne, %1, %c0_i32_0 : i32
    scf.if %2 {
      %c0_48 = arith.constant 0 : index
      %c0_49 = arith.constant 0 : index
      %c0_50 = arith.constant 0 : index
      %147 = vector.load %arg1[%c0_48, %c0_49, %c0_50] : memref<2x8x32xf32, #tpu.memory_space<vmem>>, vector<2x8x32xf32>
      %148 = vector.shape_cast %147 : vector<2x8x32xf32> to vector<16x32xf32>
      %c0_51 = arith.constant 0 : index
      %c0_52 = arith.constant 0 : index
      %149 = vector.load %arg3[%c0_51, %c0_52] : memref<2x32xf32, #tpu.memory_space<vmem>>, vector<1x32xf32>
      %c1 = arith.constant 1 : index
      %c0_53 = arith.constant 0 : index
      %150 = vector.load %arg3[%c1, %c0_53] : memref<2x32xf32, #tpu.memory_space<vmem>>, vector<1x32xf32>
      %cst_54 = arith.constant dense<0.000000e+00> : vector<16xf32>
      %151 = vector.multi_reduction <add>, %148, %cst_54 [1] : vector<16x32xf32> to vector<16xf32>
      %152 = vector.shape_cast %151 : vector<16xf32> to vector<16x1xf32>
      %cst_55 = arith.constant 3.200000e+01 : f32
      %153 = vector.broadcast %cst_55 : f32 to vector<16x1xf32>
      %154 = arith.divf %152, %153 : vector<16x1xf32>
      %155 = vector.broadcast %154 : vector<16x1xf32> to vector<16x32xf32>
      %156 = arith.subf %148, %155 : vector<16x32xf32>
      %157 = arith.mulf %156, %156 : vector<16x32xf32>
      %cst_56 = arith.constant dense<0.000000e+00> : vector<16xf32>
      %158 = vector.multi_reduction <add>, %157, %cst_56 [1] : vector<16x32xf32> to vector<16xf32>
      %159 = vector.shape_cast %158 : vector<16xf32> to vector<16x1xf32>
      %cst_57 = arith.constant 3.200000e+01 : f32
      %160 = vector.broadcast %cst_57 : f32 to vector<16x1xf32>
      %161 = arith.divf %159, %160 : vector<16x1xf32>
      %162 = vector.broadcast %154 : vector<16x1xf32> to vector<16x32xf32>
      %163 = arith.subf %148, %162 : vector<16x32xf32>
      %cst_58 = arith.constant 9.99999996E-13 : f32
      %164 = vector.broadcast %cst_58 : f32 to vector<16x1xf32>
      %165 = arith.addf %161, %164 : vector<16x1xf32>
      %166 = math.rsqrt %165 : vector<16x1xf32>
      %167 = vector.broadcast %166 : vector<16x1xf32> to vector<16x32xf32>
      %168 = arith.mulf %163, %167 : vector<16x32xf32>
      %169 = vector.broadcast %149 : vector<1x32xf32> to vector<16x32xf32>
      %170 = arith.mulf %168, %169 : vector<16x32xf32>
      %171 = vector.broadcast %150 : vector<1x32xf32> to vector<16x32xf32>
      %172 = arith.addf %170, %171 : vector<16x32xf32>
      %c0_59 = arith.constant 0 : index
      %c0_60 = arith.constant 0 : index
      %173 = vector.load %arg10[%c0_59, %c0_60] : memref<16x32xf32, #tpu.memory_space<vmem>>, vector<16x32xf32>
      tpu.vector_store %arg10[%c0_59, %c0_60], %172 {strides = array<i32>} : memref<16x32xf32, #tpu.memory_space<vmem>>, vector<16x32xf32>,
    } else {
    }
    %c0 = arith.constant 0 : index
    %c0_1 = arith.constant 0 : index
    %3 = vector.load %arg10[%c0, %c0_1] : memref<16x32xf32, #tpu.memory_space<vmem>>, vector<16x32xf32>
    %4 = arith.truncf %3 : vector<16x32xf32> to vector<16x32xbf16>
    %c0_2 = arith.constant 0 : index
    %c0_3 = arith.constant 0 : index
    %c0_4 = arith.constant 0 : index
    %5 = vector.load %arg8[%c0_2, %c0_3, %c0_4] : memref<1x8x96xf32, #tpu.memory_space<vmem>>, vector<1x8x96xf32>
    %6 = vector.shape_cast %5 : vector<1x8x96xf32> to vector<8x96xf32>
    %7 = vector.extract_strided_slice %6 {offsets = [0, 0], sizes = [1, 96], strides = [1, 1]} : vector<8x96xf32> to vector<1x96xf32>
    %8 = vector.extract_strided_slice %6 {offsets = [1, 0], sizes = [1, 32], strides = [1, 1]} : vector<8x96xf32> to vector<1x32xf32>
    %9 = vector.extract_strided_slice %6 {offsets = [2, 0], sizes = [1, 32], strides = [1, 1]} : vector<8x96xf32> to vector<1x32xf32>
    %10 = vector.extract_strided_slice %6 {offsets = [3, 0], sizes = [1, 32], strides = [1, 1]} : vector<8x96xf32> to vector<1x32xf32>
    %11 = vector.extract_strided_slice %6 {offsets = [4, 0], sizes = [1, 64], strides = [1, 1]} : vector<8x96xf32> to vector<1x64xf32>
    %12 = vector.extract_strided_slice %6 {offsets = [5, 0], sizes = [1, 32], strides = [1, 1]} : vector<8x96xf32> to vector<1x32xf32>
    %13 = vector.extract_strided_slice %6 {offsets = [6, 0], sizes = [1, 32], strides = [1, 1]} : vector<8x96xf32> to vector<1x32xf32>
    %14 = vector.extract_strided_slice %6 {offsets = [7, 0], sizes = [1, 32], strides = [1, 1]} : vector<8x96xf32> to vector<1x32xf32>
    %c0_5 = arith.constant 0 : index
    %c0_6 = arith.constant 0 : index
    %c0_7 = arith.constant 0 : index
    %15 = vector.load %arg4[%c0_5, %c0_6, %c0_7] : memref<1x32x96xbf16, #tpu.memory_space<vmem>>, vector<1x32x96xbf16>
    %16 = vector.shape_cast %15 : vector<1x32x96xbf16> to vector<32x96xbf16>
    %cst = arith.constant dense<0.000000e+00> : vector<16x96xf32>
    %17 = tpu.matmul %4, %16, %cst {dimension_numbers = #tpu.dot_dimension_numbers<[1], [0], [0], [1], [0, 0, 1, 1], [], []>} : vector<16x32xbf16>, vector<32x96xbf16>, vector<16x96xf32> -> vector<16x96xf32>
    %18 = vector.broadcast %7 : vector<1x96xf32> to vector<16x96xf32>
    %19 = arith.addf %17, %18 : vector<16x96xf32>
    %20 = vector.shape_cast %19 : vector<16x96xf32> to vector<2x8x96xf32>
    %c0_8 = arith.constant 0 : index
    %c0_9 = arith.constant 0 : index
    %c0_10 = arith.constant 0 : index
    %21 = vector.load %arg2[%c0_8, %c0_9, %c0_10] : memref<2x1x8xf32, #tpu.memory_space<vmem>>, vector<2x1x8xf32>
    %22 = vector.extract_strided_slice %20 {offsets = [0, 0, 0], sizes = [2, 8, 16], strides = [1, 1, 1]} : vector<2x8x96xf32> to vector<2x8x16xf32>
    %23 = arith.truncf %22 : vector<2x8x16xf32> to vector<2x8x16xbf16>
    %24 = vector.extract_strided_slice %20 {offsets = [0, 0, 32], sizes = [2, 8, 16], strides = [1, 1, 1]} : vector<2x8x96xf32> to vector<2x8x16xf32>
    %25 = arith.truncf %24 : vector<2x8x16xf32> to vector<2x8x16xbf16>
    %26 = vector.extract_strided_slice %20 {offsets = [0, 0, 64], sizes = [2, 8, 16], strides = [1, 1, 1]} : vector<2x8x96xf32> to vector<2x8x16xf32>
    %27 = arith.truncf %26 : vector<2x8x16xf32> to vector<2x8x16xbf16>
    "tpu.trace_start"() <{level = 10 : i32, message = "bqd,bkd->bqk"}> : () -> ()
    %cst_11 = arith.constant dense<0.000000e+00> : vector<2x8x8xf32>
    %28 = tpu.matmul %23, %25, %cst_11 {dimension_numbers = #tpu.dot_dimension_numbers<[2], [2], [1], [1], [0, 0, 0, 1, 1, 1], [0], [0]>} : vector<2x8x16xbf16>, vector<2x8x16xbf16>, vector<2x8x8xf32> -> vector<2x8x8xf32>
    "tpu.trace_stop"() : () -> ()
    %29 = vector.broadcast %21 : vector<2x1x8xf32> to vector<2x8x8xf32>
    %30 = arith.addf %28, %29 : vector<2x8x8xf32>
    %cst_12 = arith.constant dense<0xFF800000> : vector<2x8xf32>
    %31 = vector.multi_reduction <maximumf>, %30, %cst_12 [2] : vector<2x8x8xf32> to vector<2x8xf32>
    %32 = vector.shape_cast %31 : vector<2x8xf32> to vector<2x8x1xf32>
    %33 = vector.broadcast %32 : vector<2x8x1xf32> to vector<2x8x8xf32>
    %34 = arith.subf %30, %33 : vector<2x8x8xf32>
    %35 = math.exp %34 : vector<2x8x8xf32>
    %cst_13 = arith.constant dense<0.000000e+00> : vector<2x8xf32>
    %36 = vector.multi_reduction <add>, %35, %cst_13 [2] : vector<2x8x8xf32> to vector<2x8xf32>
    %37 = vector.shape_cast %36 : vector<2x8xf32> to vector<2x8x1xf32>
    %38 = tpu.reciprocal %37 {approx = true} : vector<2x8x1xf32> -> vector<2x8x1xf32>
    %39 = vector.broadcast %38 : vector<2x8x1xf32> to vector<2x8x8xf32>
    %40 = arith.mulf %35, %39 : vector<2x8x8xf32>
    %41 = arith.truncf %40 : vector<2x8x8xf32> to vector<2x8x8xbf16>
    "tpu.trace_start"() <{level = 10 : i32, message = "bqk,bkd->bqd"}> : () -> ()
    %cst_14 = arith.constant dense<0.000000e+00> : vector<2x8x16xf32>
    %42 = tpu.matmul %41, %27, %cst_14 {dimension_numbers = #tpu.dot_dimension_numbers<[2], [1], [1], [2], [0, 0, 0, 1, 1, 2], [0], [0]>} : vector<2x8x8xbf16>, vector<2x8x16xbf16>, vector<2x8x16xf32> -> vector<2x8x16xf32>
    "tpu.trace_stop"() : () -> ()
    %43 = vector.extract_strided_slice %20 {offsets = [0, 0, 16], sizes = [2, 8, 16], strides = [1, 1, 1]} : vector<2x8x96xf32> to vector<2x8x16xf32>
    %44 = arith.truncf %43 : vector<2x8x16xf32> to vector<2x8x16xbf16>
    %45 = vector.extract_strided_slice %20 {offsets = [0, 0, 48], sizes = [2, 8, 16], strides = [1, 1, 1]} : vector<2x8x96xf32> to vector<2x8x16xf32>
    %46 = arith.truncf %45 : vector<2x8x16xf32> to vector<2x8x16xbf16>
    %47 = vector.extract_strided_slice %20 {offsets = [0, 0, 80], sizes = [2, 8, 16], strides = [1, 1, 1]} : vector<2x8x96xf32> to vector<2x8x16xf32>
    %48 = arith.truncf %47 : vector<2x8x16xf32> to vector<2x8x16xbf16>
    "tpu.trace_start"() <{level = 10 : i32, message = "bqd,bkd->bqk"}> : () -> ()
    %cst_15 = arith.constant dense<0.000000e+00> : vector<2x8x8xf32>
    %49 = tpu.matmul %44, %46, %cst_15 {dimension_numbers = #tpu.dot_dimension_numbers<[2], [2], [1], [1], [0, 0, 0, 1, 1, 1], [0], [0]>} : vector<2x8x16xbf16>, vector<2x8x16xbf16>, vector<2x8x8xf32> -> vector<2x8x8xf32>
    "tpu.trace_stop"() : () -> ()
    %50 = vector.broadcast %21 : vector<2x1x8xf32> to vector<2x8x8xf32>
    %51 = arith.addf %49, %50 : vector<2x8x8xf32>
    %cst_16 = arith.constant dense<0xFF800000> : vector<2x8xf32>
    %52 = vector.multi_reduction <maximumf>, %51, %cst_16 [2] : vector<2x8x8xf32> to vector<2x8xf32>
    %53 = vector.shape_cast %52 : vector<2x8xf32> to vector<2x8x1xf32>
    %54 = vector.broadcast %53 : vector<2x8x1xf32> to vector<2x8x8xf32>
    %55 = arith.subf %51, %54 : vector<2x8x8xf32>
    %56 = math.exp %55 : vector<2x8x8xf32>
    %cst_17 = arith.constant dense<0.000000e+00> : vector<2x8xf32>
    %57 = vector.multi_reduction <add>, %56, %cst_17 [2] : vector<2x8x8xf32> to vector<2x8xf32>
    %58 = vector.shape_cast %57 : vector<2x8xf32> to vector<2x8x1xf32>
    %59 = tpu.reciprocal %58 {approx = true} : vector<2x8x1xf32> -> vector<2x8x1xf32>
    %60 = vector.broadcast %59 : vector<2x8x1xf32> to vector<2x8x8xf32>
    %61 = arith.mulf %56, %60 : vector<2x8x8xf32>
    %62 = arith.truncf %61 : vector<2x8x8xf32> to vector<2x8x8xbf16>
    "tpu.trace_start"() <{level = 10 : i32, message = "bqk,bkd->bqd"}> : () -> ()
    %cst_18 = arith.constant dense<0.000000e+00> : vector<2x8x16xf32>
    %63 = tpu.matmul %62, %48, %cst_18 {dimension_numbers = #tpu.dot_dimension_numbers<[2], [1], [1], [2], [0, 0, 0, 1, 1, 2], [0], [0]>} : vector<2x8x8xbf16>, vector<2x8x16xbf16>, vector<2x8x16xf32> -> vector<2x8x16xf32>
    "tpu.trace_stop"() : () -> ()
    %64 = tpu.concatenate %42, %63 in 2 : vector<2x8x16xf32>, vector<2x8x16xf32> -> vector<2x8x32xf32>
    %65 = vector.shape_cast %64 : vector<2x8x32xf32> to vector<16x32xf32>
    %66 = arith.truncf %65 : vector<16x32xf32> to vector<16x32xbf16>
    %c0_19 = arith.constant 0 : index
    %c0_20 = arith.constant 0 : index
    %c0_21 = arith.constant 0 : index
    %67 = vector.load %arg5[%c0_19, %c0_20, %c0_21] : memref<1x32x32xbf16, #tpu.memory_space<vmem>>, vector<1x32x32xbf16>
    %68 = vector.shape_cast %67 : vector<1x32x32xbf16> to vector<32x32xbf16>
    %cst_22 = arith.constant dense<0.000000e+00> : vector<16x32xf32>
    %69 = tpu.matmul %66, %68, %cst_22 {dimension_numbers = #tpu.dot_dimension_numbers<[1], [0], [0], [1], [0, 0, 1, 1], [], []>} : vector<16x32xbf16>, vector<32x32xbf16>, vector<16x32xf32> -> vector<16x32xf32>
    %70 = vector.broadcast %8 : vector<1x32xf32> to vector<16x32xf32>
    %71 = arith.addf %69, %70 : vector<16x32xf32>
    %72 = arith.addf %3, %71 : vector<16x32xf32>
    %cst_23 = arith.constant dense<0.000000e+00> : vector<16xf32>
    %73 = vector.multi_reduction <add>, %72, %cst_23 [1] : vector<16x32xf32> to vector<16xf32>
    %74 = vector.shape_cast %73 : vector<16xf32> to vector<16x1xf32>
    %cst_24 = arith.constant 3.200000e+01 : f32
    %75 = vector.broadcast %cst_24 : f32 to vector<16x1xf32>
    %76 = arith.divf %74, %75 : vector<16x1xf32>
    %77 = vector.broadcast %76 : vector<16x1xf32> to vector<16x32xf32>
    %78 = arith.subf %72, %77 : vector<16x32xf32>
    %79 = arith.mulf %78, %78 : vector<16x32xf32>
    %cst_25 = arith.constant dense<0.000000e+00> : vector<16xf32>
    %80 = vector.multi_reduction <add>, %79, %cst_25 [1] : vector<16x32xf32> to vector<16xf32>
    %81 = vector.shape_cast %80 : vector<16xf32> to vector<16x1xf32>
    %cst_26 = arith.constant 3.200000e+01 : f32
    %82 = vector.broadcast %cst_26 : f32 to vector<16x1xf32>
    %83 = arith.divf %81, %82 : vector<16x1xf32>
    %84 = vector.broadcast %76 : vector<16x1xf32> to vector<16x32xf32>
    %85 = arith.subf %72, %84 : vector<16x32xf32>
    %cst_27 = arith.constant 9.99999996E-13 : f32
    %86 = vector.broadcast %cst_27 : f32 to vector<16x1xf32>
    %87 = arith.addf %83, %86 : vector<16x1xf32>
    %88 = math.rsqrt %87 : vector<16x1xf32>
    %89 = vector.broadcast %88 : vector<16x1xf32> to vector<16x32xf32>
    %90 = arith.mulf %85, %89 : vector<16x32xf32>
    %91 = vector.broadcast %9 : vector<1x32xf32> to vector<16x32xf32>
    %92 = arith.mulf %90, %91 : vector<16x32xf32>
    %93 = vector.broadcast %10 : vector<1x32xf32> to vector<16x32xf32>
    %94 = arith.addf %92, %93 : vector<16x32xf32>
    %95 = arith.truncf %94 : vector<16x32xf32> to vector<16x32xbf16>
    %c0_28 = arith.constant 0 : index
    %c0_29 = arith.constant 0 : index
    %c0_30 = arith.constant 0 : index
    %96 = vector.load %arg6[%c0_28, %c0_29, %c0_30] : memref<1x32x64xbf16, #tpu.memory_space<vmem>>, vector<1x32x64xbf16>
    %97 = vector.shape_cast %96 : vector<1x32x64xbf16> to vector<32x64xbf16>
    %cst_31 = arith.constant dense<0.000000e+00> : vector<16x64xf32>
    %98 = tpu.matmul %95, %97, %cst_31 {dimension_numbers = #tpu.dot_dimension_numbers<[1], [0], [0], [1], [0, 0, 1, 1], [], []>} : vector<16x32xbf16>, vector<32x64xbf16>, vector<16x64xf32> -> vector<16x64xf32>
    %99 = vector.broadcast %11 : vector<1x64xf32> to vector<16x64xf32>
    %100 = arith.addf %98, %99 : vector<16x64xf32>
    %101 = arith.mulf %100, %100 : vector<16x64xf32>
    %102 = arith.mulf %100, %101 : vector<16x64xf32>
    %cst_32 = arith.constant 4.471500e-02 : f32
    %103 = vector.broadcast %cst_32 : f32 to vector<16x64xf32>
    %104 = arith.mulf %103, %102 : vector<16x64xf32>
    %105 = arith.addf %100, %104 : vector<16x64xf32>
    %cst_33 = arith.constant 0.797884583 : f32
    %106 = vector.broadcast %cst_33 : f32 to vector<16x64xf32>
    %107 = arith.mulf %106, %105 : vector<16x64xf32>
    %108 = math.tanh %107 : vector<16x64xf32>
    %cst_34 = arith.constant 1.000000e+00 : f32
    %109 = vector.broadcast %cst_34 : f32 to vector<16x64xf32>
    %110 = arith.addf %109, %108 : vector<16x64xf32>
    %cst_35 = arith.constant 5.000000e-01 : f32
    %111 = vector.broadcast %cst_35 : f32 to vector<16x64xf32>
    %112 = arith.mulf %111, %110 : vector<16x64xf32>
    %113 = arith.mulf %100, %112 : vector<16x64xf32>
    %114 = arith.truncf %113 : vector<16x64xf32> to vector<16x64xbf16>
    %c0_36 = arith.constant 0 : index
    %c0_37 = arith.constant 0 : index
    %c0_38 = arith.constant 0 : index
    %115 = vector.load %arg7[%c0_36, %c0_37, %c0_38] : memref<1x64x32xbf16, #tpu.memory_space<vmem>>, vector<1x64x32xbf16>
    %116 = vector.shape_cast %115 : vector<1x64x32xbf16> to vector<64x32xbf16>
    %cst_39 = arith.constant dense<0.000000e+00> : vector<16x32xf32>
    %117 = tpu.matmul %114, %116, %cst_39 {dimension_numbers = #tpu.dot_dimension_numbers<[1], [0], [0], [1], [0, 0, 1, 1], [], []>} : vector<16x64xbf16>, vector<64x32xbf16>, vector<16x32xf32> -> vector<16x32xf32>
    %118 = vector.broadcast %12 : vector<1x32xf32> to vector<16x32xf32>
    %119 = arith.addf %117, %118 : vector<16x32xf32>
    %120 = arith.addf %94, %119 : vector<16x32xf32>
    %cst_40 = arith.constant dense<0.000000e+00> : vector<16xf32>
    %121 = vector.multi_reduction <add>, %120, %cst_40 [1] : vector<16x32xf32> to vector<16xf32>
    %122 = vector.shape_cast %121 : vector<16xf32> to vector<16x1xf32>
    %cst_41 = arith.constant 3.200000e+01 : f32
    %123 = vector.broadcast %cst_41 : f32 to vector<16x1xf32>
    %124 = arith.divf %122, %123 : vector<16x1xf32>
    %125 = vector.broadcast %124 : vector<16x1xf32> to vector<16x32xf32>
    %126 = arith.subf %120, %125 : vector<16x32xf32>
    %127 = arith.mulf %126, %126 : vector<16x32xf32>
    %cst_42 = arith.constant dense<0.000000e+00> : vector<16xf32>
    %128 = vector.multi_reduction <add>, %127, %cst_42 [1] : vector<16x32xf32> to vector<16xf32>
    %129 = vector.shape_cast %128 : vector<16xf32> to vector<16x1xf32>
    %cst_43 = arith.constant 3.200000e+01 : f32
    %130 = vector.broadcast %cst_43 : f32 to vector<16x1xf32>
    %131 = arith.divf %129, %130 : vector<16x1xf32>
    %132 = vector.broadcast %124 : vector<16x1xf32> to vector<16x32xf32>
    %133 = arith.subf %120, %132 : vector<16x32xf32>
    %cst_44 = arith.constant 9.99999996E-13 : f32
    %134 = vector.broadcast %cst_44 : f32 to vector<16x1xf32>
    %135 = arith.addf %131, %134 : vector<16x1xf32>
    %136 = math.rsqrt %135 : vector<16x1xf32>
    %137 = vector.broadcast %136 : vector<16x1xf32> to vector<16x32xf32>
    %138 = arith.mulf %133, %137 : vector<16x32xf32>
    %139 = vector.broadcast %13 : vector<1x32xf32> to vector<16x32xf32>
    %140 = arith.mulf %138, %139 : vector<16x32xf32>
    %141 = vector.broadcast %14 : vector<1x32xf32> to vector<16x32xf32>
    %142 = arith.addf %140, %141 : vector<16x32xf32>
    %c0_45 = arith.constant 0 : index
    %c0_46 = arith.constant 0 : index
    %143 = vector.load %arg10[%c0_45, %c0_46] : memref<16x32xf32, #tpu.memory_space<vmem>>, vector<16x32xf32>
    tpu.vector_store %arg10[%c0_45, %c0_46], %142 {strides = array<i32>} : memref<16x32xf32, #tpu.memory_space<vmem>>, vector<16x32xf32>,
    %c1_i32 = arith.constant 1 : i32
    %144 = arith.cmpi eq, %arg0, %c1_i32 : i32
    %145 = arith.extui %144 : i1 to i32
    %c0_i32_47 = arith.constant 0 : i32
    %146 = arith.cmpi ne, %145, %c0_i32_47 : i32
    scf.if %146 {
      %147 = vector.shape_cast %142 : vector<16x32xf32> to vector<2x8x32xf32>
      %148 = vector.extract_strided_slice %147 {offsets = [0, 0, 0], sizes = [2, 1, 32], strides = [1, 1, 1]} : vector<2x8x32xf32> to vector<2x1x32xf32>
      %c0_48 = arith.constant 0 : index
      %c0_49 = arith.constant 0 : index
      %c0_50 = arith.constant 0 : index
      %149 = vector.load %arg9[%c0_48, %c0_49, %c0_50] : memref<2x1x32xf32, #tpu.memory_space<vmem>>, vector<2x1x32xf32>
      tpu.vector_store %arg9[%c0_48, %c0_49, %c0_50], %148 {strides = array<i32>} : memref<2x1x32xf32, #tpu.memory_space<vmem>>, vector<2x1x32xf32>,
    } else {
    }
    return
  }
  func.func @transform_0(%arg0: i32) -> (i32, i32, i32) {
    %c0_i32 = arith.constant 0 : i32
    %c0_i32_0 = arith.constant 0 : i32
    %c0_i32_1 = arith.constant 0 : i32
    %c0_i32_2 = arith.constant 0 : i32
    return %c0_i32, %c0_i32_0, %c0_i32_1 : i32, i32, i32
  }
  func.func @transform_1(%arg0: i32) -> (i32, i32, i32) {
    %c0_i32 = arith.constant 0 : i32
    %c0_i32_0 = arith.constant 0 : i32
    %c0_i32_1 = arith.constant 0 : i32
    %c0_i32_2 = arith.constant 0 : i32
    return %c0_i32, %c0_i32_0, %c0_i32_1 : i32, i32, i32
  }
  func.func @transform_2(%arg0: i32) -> (i32, i32) {
    %c0_i32 = arith.constant 0 : i32
    %c0_i32_0 = arith.constant 0 : i32
    %c0_i32_1 = arith.constant 0 : i32
    return %c0_i32, %c0_i32_0 : i32, i32
  }
  func.func @transform_3(%arg0: i32) -> (i32, i32, i32) {
    %c0_i32 = arith.constant 0 : i32
    %c0_i32_0 = arith.constant 0 : i32
    %c0_i32_1 = arith.constant 0 : i32
    return %arg0, %c0_i32, %c0_i32_0 : i32, i32, i32
  }
  func.func @transform_4(%arg0: i32) -> (i32, i32, i32) {
    %c0_i32 = arith.constant 0 : i32
    %c0_i32_0 = arith.constant 0 : i32
    %c0_i32_1 = arith.constant 0 : i32
    return %arg0, %c0_i32, %c0_i32_0 : i32, i32, i32
  }
  func.func @transform_5(%arg0: i32) -> (i32, i32, i32) {
    %c0_i32 = arith.constant 0 : i32
    %c0_i32_0 = arith.constant 0 : i32
    %c0_i32_1 = arith.constant 0 : i32
    return %arg0, %c0_i32, %c0_i32_0 : i32, i32, i32
  }
  func.func @transform_6(%arg0: i32) -> (i32, i32, i32) {
    %c0_i32 = arith.constant 0 : i32
    %c0_i32_0 = arith.constant 0 : i32
    %c0_i32_1 = arith.constant 0 : i32
    return %arg0, %c0_i32, %c0_i32_0 : i32, i32, i32
  }
  func.func @transform_7(%arg0: i32) -> (i32, i32, i32) {
    %c0_i32 = arith.constant 0 : i32
    %c0_i32_0 = arith.constant 0 : i32
    %c0_i32_1 = arith.constant 0 : i32
    return %arg0, %c0_i32, %c0_i32_0 : i32, i32, i32
  }
  func.func @transform_8(%arg0: i32) -> (i32, i32, i32) {
    %c0_i32 = arith.constant 0 : i32
    %c0_i32_0 = arith.constant 0 : i32
    %c0_i32_1 = arith.constant 0 : i32
    %c0_i32_2 = arith.constant 0 : i32
    return %c0_i32, %c0_i32_0, %c0_i32_1 : i32, i32, i32
  }
}

</mosaic_0001>

<llo_original>
// kernel: bert_entail_cls_forward.1
$region0: #{bert_entail_cls_forward.1}
  #allocation0 [shape = 'u32[]', space=smem, size = 0x4, offset = 0x4, fixed_abs, tag = 'smem constant byte address 0x4 - core index']
  #allocation1 [shape = 'u32[144,128]{1,0:T(1,128)}', space=vmem, size = 0x12000, scoped, tag = 'internal scratch']
  #allocation2 [shape = 'f32[16,32]{1,0:T(8,128)}', space=vmem, size = 0x2000, scoped, tag = 'scratch operand']
  %s0 = inlined_call_operand.vmem [shape: f32[2,8,32], index: 0, kind: input, shape index: {}]
  %s1 = inlined_call_operand.vmem [shape: f32[2,1,8], index: 1, kind: input, shape index: {}]
  %s2 = inlined_call_operand.vmem [shape: f32[2,32], index: 2, kind: input, shape index: {}]
  %s3 = inlined_call_operand.vmem [shape: bf16[2,32,96], index: 3, kind: input, shape index: {}]
  %s4 = inlined_call_operand.vmem [shape: bf16[2,32,32], index: 4, kind: input, shape index: {}]
  %s5 = inlined_call_operand.vmem [shape: bf16[2,32,64], index: 5, kind: input, shape index: {}]
  %s6 = inlined_call_operand.vmem [shape: bf16[2,64,32], index: 6, kind: input, shape index: {}]
  %s7 = inlined_call_operand.vmem [shape: f32[2,8,96], index: 7, kind: input, shape index: {}]
  %s8 = inlined_call_operand.hbm [shape: f32[2,1,32], index: 8, kind: output, shape index: {}]
  %s9 = sld [smem:[#allocation0]]
  $region73: #{bert_entail_cls_forward.1} parent=0
    _
  %s11 = ssub.s32 1, %s9
  %s12 = scalar_select 0, %s11, %s9
  $region1: #{bert_entail_cls_forward.1} parent=0
    #allocation3 [shape = 'u8[1024]{0}', space=vmem, size = 0x400, scoped, tag = 'output window, operand 0, single buffered']
    #allocation4 [shape = 's32[2]{0}', space=sflag, size = 0x8, scoped, tag = 'scoped memory for bert_entail_cls_forward.1']
    %13 = vsyncpa [#allocation4], 0
    loop: start=0, step=1, limit=4
    $region2: #{bert_entail_cls_forward.1} parent=1 // loop_pre_header
      _
    $region3: #{bert_entail_cls_forward.1} parent=1 // loop_header
      %s15 = sphi 0, %s19
      %p16 = scmp.ge.s32.totalorder %s15, 4
      %s23 = sphi 0, %s23
      %s25 = sphi 0, %s23
      %s26 = sphi 0, %s25
      %s40 = sphi 0, %s26
      %s44 = sphi 0, %s44
      %s46 = sphi 0, %s44
      %s47 = sphi 0, %s46
      %s61 = sphi 0, %s47
      %s65 = sphi 0, %s65
      %s67 = sphi 0, %s65
      %s68 = sphi 0, %s67
      %s82 = sphi 0, %s68
      %s88 = sphi 0, %s90
      %s91 = sphi 0, %s88
      %s92 = sphi 0, %s91
      %s108 = sphi 0, %s92
      %s114 = sphi 0, %s116
      %s117 = sphi 0, %s114
      %s118 = sphi 0, %s117
      %s134 = sphi 0, %s118
      %s140 = sphi 0, %s142
      %s143 = sphi 0, %s140
      %s144 = sphi 0, %s143
      %s160 = sphi 0, %s144
      %s166 = sphi 0, %s168
      %s169 = sphi 0, %s166
      %s170 = sphi 0, %s169
      %s186 = sphi 0, %s170
      %s192 = sphi 0, %s194
      %s195 = sphi 0, %s192
      %s196 = sphi 0, %s195
      %s212 = sphi 0, %s196
      %s216 = sphi 0, %s216
      %s218 = sphi 0, %s216
      %s219 = sphi 0, %s218
      %s233 = sphi 0, %s219
    $region4: #{bert_entail_cls_forward.1} parent=1 // loop_header_branch
      %18 = sbr.rel (%p16) target = $region8
    $region5: #{bert_entail_cls_forward.1} parent=1 // loop_body
      %s20 = ssub.s32 %s15, 1
      %s21 = ssub.s32 %s15, 2
      %s22 = sadd.s32 %s15, 1
      %s24 = sadd.s32 %s23, 1
      %p27 = scmp.eq.s32.totalorder %s15, 1
      %p28 = scmp.ne.s32.totalorder %s23, %s25
      %p29 = scmp.eq.s32.totalorder %s15, 0
      %p30 = por %p28, %p29
      %p31 = scmp.ne.s32.totalorder %s23, %s25
      %p32 = scmp.eq.s32.totalorder %s20, 1
      %p33 = por %p31, %p32
      %p34 = scmp.ne.s32.totalorder %s25, %s26
      %p35 = scmp.eq.s32.totalorder %s20, 0
      %p36 = por %p34, %p35
      %p37 = scmp.ne.s32.totalorder %s25, %s26
      %p38 = scmp.eq.s32.totalorder %s21, 1
      %p39 = por %p37, %p38
      %p41 = scmp.ne.s32.totalorder %s26, %s40
      %p42 = scmp.eq.s32.totalorder %s21, 0
      %p43 = por %p41, %p42
      %s45 = sadd.s32 %s44, 1
      %p48 = scmp.eq.s32.totalorder %s15, 1
      %p49 = scmp.ne.s32.totalorder %s44, %s46
      %p50 = scmp.eq.s32.totalorder %s15, 0
      %p51 = por %p49, %p50
      %p52 = scmp.ne.s32.totalorder %s44, %s46
      %p53 = scmp.eq.s32.totalorder %s20, 1
      %p54 = por %p52, %p53
      %p55 = scmp.ne.s32.totalorder %s46, %s47
      %p56 = scmp.eq.s32.totalorder %s20, 0
      %p57 = por %p55, %p56
      %p58 = scmp.ne.s32.totalorder %s46, %s47
      %p59 = scmp.eq.s32.totalorder %s21, 1
      %p60 = por %p58, %p59
      %p62 = scmp.ne.s32.totalorder %s47, %s61
      %p63 = scmp.eq.s32.totalorder %s21, 0
      %p64 = por %p62, %p63
      %s66 = sadd.s32 %s65, 1
      %p69 = scmp.eq.s32.totalorder %s15, 1
      %p70 = scmp.ne.s32.totalorder %s65, %s67
      %p71 = scmp.eq.s32.totalorder %s15, 0
      %p72 = por %p70, %p71
      %p73 = scmp.ne.s32.totalorder %s65, %s67
      %p74 = scmp.eq.s32.totalorder %s20, 1
      %p75 = por %p73, %p74
      %p76 = scmp.ne.s32.totalorder %s67, %s68
      %p77 = scmp.eq.s32.totalorder %s20, 0
      %p78 = por %p76, %p77
      %p79 = scmp.ne.s32.totalorder %s67, %s68
      %p80 = scmp.eq.s32.totalorder %s21, 1
      %p81 = por %p79, %p80
      %p83 = scmp.ne.s32.totalorder %s68, %s82
      %p84 = scmp.eq.s32.totalorder %s21, 0
      %p85 = por %p83, %p84
      %s86 = ssub.s32 %s15, %s22
      %p87 = scmp.eq.s32.totalorder %s86, 0
      %s89 = sadd.s32 %s88, 1
      %s90 = scalar_select %p87, %s88, %s89
      %p93 = pneg %p87
      %p94 = scmp.eq.s32.totalorder %s15, 1
      %p95 = por %p93, %p94
      %p96 = scmp.ne.s32.totalorder %s88, %s91
      %p97 = scmp.eq.s32.totalorder %s15, 0
      %p98 = por %p96, %p97
      %p99 = scmp.ne.s32.totalorder %s88, %s91
      %p100 = scmp.eq.s32.totalorder %s20, 1
      %p101 = por %p99, %p100
      %p102 = scmp.ne.s32.totalorder %s91, %s92
      %p103 = scmp.eq.s32.totalorder %s20, 0
      %p104 = por %p102, %p103
      %p105 = scmp.ne.s32.totalorder %s91, %s92
      %p106 = scmp.eq.s32.totalorder %s21, 1
      %p107 = por %p105, %p106
      %p109 = scmp.ne.s32.totalorder %s92, %s108
      %p110 = scmp.eq.s32.totalorder %s21, 0
      %p111 = por %p109, %p110
      %s112 = ssub.s32 %s15, %s22
      %p113 = scmp.eq.s32.totalorder %s112, 0
      %s115 = sadd.s32 %s114, 1
      %s116 = scalar_select %p113, %s114, %s115
      %p119 = pneg %p113
      %p120 = scmp.eq.s32.totalorder %s15, 1
      %p121 = por %p119, %p120
      %p122 = scmp.ne.s32.totalorder %s114, %s117
      %p123 = scmp.eq.s32.totalorder %s15, 0
      %p124 = por %p122, %p123
      %p125 = scmp.ne.s32.totalorder %s114, %s117
      %p126 = scmp.eq.s32.totalorder %s20, 1
      %p127 = por %p125, %p126
      %p128 = scmp.ne.s32.totalorder %s117, %s118
      %p129 = scmp.eq.s32.totalorder %s20, 0
      %p130 = por %p128, %p129
      %p131 = scmp.ne.s32.totalorder %s117, %s118
      %p132 = scmp.eq.s32.totalorder %s21, 1
      %p133 = por %p131, %p132
      %p135 = scmp.ne.s32.totalorder %s118, %s134
      %p136 = scmp.eq.s32.totalorder %s21, 0
      %p137 = por %p135, %p136
      %s138 = ssub.s32 %s15, %s22
      %p139 = scmp.eq.s32.totalorder %s138, 0
      %s141 = sadd.s32 %s140, 1
      %s142 = scalar_select %p139, %s140, %s141
      %p145 = pneg %p139
      %p146 = scmp.eq.s32.totalorder %s15, 1
      %p147 = por %p145, %p146
      %p148 = scmp.ne.s32.totalorder %s140, %s143
      %p149 = scmp.eq.s32.totalorder %s15, 0
      %p150 = por %p148, %p149
      %p151 = scmp.ne.s32.totalorder %s140, %s143
      %p152 = scmp.eq.s32.totalorder %s20, 1
      %p153 = por %p151, %p152
      %p154 = scmp.ne.s32.totalorder %s143, %s144
      %p155 = scmp.eq.s32.totalorder %s20, 0
      %p156 = por %p154, %p155
      %p157 = scmp.ne.s32.totalorder %s143, %s144
      %p158 = scmp.eq.s32.totalorder %s21, 1
      %p159 = por %p157, %p158
      %p161 = scmp.ne.s32.totalorder %s144, %s160
      %p162 = scmp.eq.s32.totalorder %s21, 0
      %p163 = por %p161, %p162
      %s164 = ssub.s32 %s15, %s22
      %p165 = scmp.eq.s32.totalorder %s164, 0
      %s167 = sadd.s32 %s166, 1
      %s168 = scalar_select %p165, %s166, %s167
      %p171 = pneg %p165
      %p172 = scmp.eq.s32.totalorder %s15, 1
      %p173 = por %p171, %p172
      %p174 = scmp.ne.s32.totalorder %s166, %s169
      %p175 = scmp.eq.s32.totalorder %s15, 0
      %p176 = por %p174, %p175
      %p177 = scmp.ne.s32.totalorder %s166, %s169
      %p178 = scmp.eq.s32.totalorder %s20, 1
      %p179 = por %p177, %p178
      %p180 = scmp.ne.s32.totalorder %s169, %s170
      %p181 = scmp.eq.s32.totalorder %s20, 0
      %p182 = por %p180, %p181
      %p183 = scmp.ne.s32.totalorder %s169, %s170
      %p184 = scmp.eq.s32.totalorder %s21, 1
      %p185 = por %p183, %p184
      %p187 = scmp.ne.s32.totalorder %s170, %s186
      %p188 = scmp.eq.s32.totalorder %s21, 0
      %p189 = por %p187, %p188
      %s190 = ssub.s32 %s15, %s22
      %p191 = scmp.eq.s32.totalorder %s190, 0
      %s193 = sadd.s32 %s192, 1
      %s194 = scalar_select %p191, %s192, %s193
      %p197 = pneg %p191
      %p198 = scmp.eq.s32.totalorder %s15, 1
      %p199 = por %p197, %p198
      %p200 = scmp.ne.s32.totalorder %s192, %s195
      %p201 = scmp.eq.s32.totalorder %s15, 0
      %p202 = por %p200, %p201
      %p203 = scmp.ne.s32.totalorder %s192, %s195
      %p204 = scmp.eq.s32.totalorder %s20, 1
      %p205 = por %p203, %p204
      %p206 = scmp.ne.s32.totalorder %s195, %s196
      %p207 = scmp.eq.s32.totalorder %s20, 0
      %p208 = por %p206, %p207
      %p209 = scmp.ne.s32.totalorder %s195, %s196
      %p210 = scmp.eq.s32.totalorder %s21, 1
      %p211 = por %p209, %p210
      %p213 = scmp.ne.s32.totalorder %s196, %s212
      %p214 = scmp.eq.s32.totalorder %s21, 0
      %p215 = por %p213, %p214
      %s217 = sadd.s32 %s216, 1
      %p220 = scmp.eq.s32.totalorder %s15, 1
      %p221 = scmp.ne.s32.totalorder %s216, %s218
      %p222 = scmp.eq.s32.totalorder %s15, 0
      %p223 = por %p221, %p222
      %p224 = scmp.ne.s32.totalorder %s216, %s218
      %p225 = scmp.eq.s32.totalorder %s20, 1
      %p226 = por %p224, %p225
      %p227 = scmp.ne.s32.totalorder %s218, %s219
      %p228 = scmp.eq.s32.totalorder %s20, 0
      %p229 = por %p227, %p228
      %p230 = scmp.ne.s32.totalorder %s218, %s219
      %p231 = scmp.eq.s32.totalorder %s21, 1
      %p232 = por %p230, %p231
      %p234 = scmp.ne.s32.totalorder %s219, %s233
      %p235 = scmp.eq.s32.totalorder %s21, 0
      %p236 = por %p234, %p235
      %p237 = scmp.le.s32.totalorder 1, %s15
      %p238 = scmp.lt.s32.totalorder %s15, 3
      %p239 = pnand %p237, %p238
      %p240 = pneg %p239
      // Predicated region
      $region9: #{bert_entail_cls_forward.1} parent=5 // pred_check
        _
      $region10: #{bert_entail_cls_forward.1} parent=5 // pred_check_branch
        %242 = sbr.rel (%p239) target = $region12
      $region11: #{bert_entail_cls_forward.1} parent=5 // pred_region
        %s243 = ssub.s32 %s15, 1
        // Predicated region
        $region13: #{bert_entail_cls_forward.1} parent=11 // pred_check
          %p244 = pneg %p36
        $region14: #{bert_entail_cls_forward.1} parent=11 // pred_check_branch
          %246 = sbr.rel (%p244) target = $region16
        $region15: #{bert_entail_cls_forward.1} parent=11 // pred_region
          _
        $region16: #{bert_entail_cls_forward.1} parent=11 // pred_fallthru
          _
        // Predicated region
        $region17: #{bert_entail_cls_forward.1} parent=11 // pred_check
          %p247 = pneg %p57
        $region18: #{bert_entail_cls_forward.1} parent=11 // pred_check_branch
          %249 = sbr.rel (%p247) target = $region20
        $region19: #{bert_entail_cls_forward.1} parent=11 // pred_region
          _
        $region20: #{bert_entail_cls_forward.1} parent=11 // pred_fallthru
          _
        // Predicated region
        $region21: #{bert_entail_cls_forward.1} parent=11 // pred_check
          %p250 = pneg %p78
        $region22: #{bert_entail_cls_forward.1} parent=11 // pred_check_branch
          %252 = sbr.rel (%p250) target = $region24
        $region23: #{bert_entail_cls_forward.1} parent=11 // pred_region
          _
        $region24: #{bert_entail_cls_forward.1} parent=11 // pred_fallthru
          _
      $region12: #{bert_entail_cls_forward.1} parent=5 // pred_fallthru
        _
      %p253 = scmp.lt.s32.totalorder %s15, 2
      // Predicated region
      $region25: #{bert_entail_cls_forward.1} parent=5 // pred_check
        %p254 = pneg %p253
      $region26: #{bert_entail_cls_forward.1} parent=5 // pred_check_branch
        %256 = sbr.rel (%p254) target = $region28
      $region27: #{bert_entail_cls_forward.1} parent=5 // pred_region
        // Predicated region
        $region29: #{bert_entail_cls_forward.1} parent=27 // pred_check
          %p257 = pneg %p98
        $region30: #{bert_entail_cls_forward.1} parent=27 // pred_check_branch
          %259 = sbr.rel (%p257) target = $region32
        $region31: #{bert_entail_cls_forward.1} parent=27 // pred_region
          %p260 = scmp.lt.s32.totalorder %s15, 1
          %s261 = scalar_select %p260, %s15, 1
          %s262 = smul.addr %s261, 4
          %s263 = smul.addr %s262, 4
          %s264 = scalar_lea.vmem %s3, %s263
        $region32: #{bert_entail_cls_forward.1} parent=27 // pred_fallthru
          _
        // Predicated region
        $region33: #{bert_entail_cls_forward.1} parent=27 // pred_check
          %p265 = pneg %p124
        $region34: #{bert_entail_cls_forward.1} parent=27 // pred_check_branch
          %267 = sbr.rel (%p265) target = $region36
        $region35: #{bert_entail_cls_forward.1} parent=27 // pred_region
          %p268 = scmp.lt.s32.totalorder %s15, 1
          %s269 = scalar_select %p268, %s15, 1
          %s270 = smul.addr %s269, 4
          %s271 = smul.addr %s270, 4
          %s272 = scalar_lea.vmem %s4, %s271
        $region36: #{bert_entail_cls_forward.1} parent=27 // pred_fallthru
          _
        // Predicated region
        $region37: #{bert_entail_cls_forward.1} parent=27 // pred_check
          %p273 = pneg %p150
        $region38: #{bert_entail_cls_forward.1} parent=27 // pred_check_branch
          %275 = sbr.rel (%p273) target = $region40
        $region39: #{bert_entail_cls_forward.1} parent=27 // pred_region
          %p276 = scmp.lt.s32.totalorder %s15, 1
          %s277 = scalar_select %p276, %s15, 1
          %s278 = smul.addr %s277, 4
          %s279 = smul.addr %s278, 4
          %s280 = scalar_lea.vmem %s5, %s279
        $region40: #{bert_entail_cls_forward.1} parent=27 // pred_fallthru
          _
        // Predicated region
        $region41: #{bert_entail_cls_forward.1} parent=27 // pred_check
          %p281 = pneg %p176
        $region42: #{bert_entail_cls_forward.1} parent=27 // pred_check_branch
          %283 = sbr.rel (%p281) target = $region44
        $region43: #{bert_entail_cls_forward.1} parent=27 // pred_region
          %p284 = scmp.lt.s32.totalorder %s15, 1
          %s285 = scalar_select %p284, %s15, 1
          %s286 = smul.addr %s285, 8
          %s287 = smul.addr %s286, 4
          %s288 = scalar_lea.vmem %s6, %s287
        $region44: #{bert_entail_cls_forward.1} parent=27 // pred_fallthru
          _
        // Predicated region
        $region45: #{bert_entail_cls_forward.1} parent=27 // pred_check
          %p289 = pneg %p202
        $region46: #{bert_entail_cls_forward.1} parent=27 // pred_check_branch
          %291 = sbr.rel (%p289) target = $region48
        $region47: #{bert_entail_cls_forward.1} parent=27 // pred_region
          %p292 = scmp.lt.s32.totalorder %s15, 1
          %s293 = scalar_select %p292, %s15, 1
          %s294 = smul.addr %s293, 8
          %s295 = scalar_lea.vmem %s7, %s294
        $region48: #{bert_entail_cls_forward.1} parent=27 // pred_fallthru
          _
      $region28: #{bert_entail_cls_forward.1} parent=5 // pred_fallthru
        _
      %p296 = scmp.le.s32.totalorder 1, %s15
      %p297 = scmp.lt.s32.totalorder %s15, 3
      %p298 = pnand %p296, %p297
      %p299 = pneg %p298
      // Predicated region
      $region49: #{bert_entail_cls_forward.1} parent=5 // pred_check
        _
      $region50: #{bert_entail_cls_forward.1} parent=5 // pred_check_branch
        %301 = sbr.rel (%p298) target = $region52
      $region51: #{bert_entail_cls_forward.1} parent=5 // pred_region
        %s302 = ssub.s32 %s15, 1
        %p303 = pneg %p36
        %p304 = pneg %p33
        %p305 = pneg %p57
        %p306 = pneg %p54
        %p307 = pneg %p78
        %p308 = pneg %p75
        %p309 = scmp.lt.s32.totalorder %s20, 1
        %s310 = scalar_select %p309, %s20, 1
        %s311 = smul.addr %s310, 4
        %s312 = smul.addr %s311, 4
        %s313 = scalar_lea.vmem %s3, %s312
        %p314 = pneg %p104
        %p315 = pneg %p101
        %p316 = scmp.lt.s32.totalorder %s20, 1
        %s317 = scalar_select %p316, %s20, 1
        %s318 = smul.addr %s317, 4
        %s319 = smul.addr %s318, 4
        %s320 = scalar_lea.vmem %s4, %s319
        %p321 = pneg %p130
        %p322 = pneg %p127
        %p323 = scmp.lt.s32.totalorder %s20, 1
        %s324 = scalar_select %p323, %s20, 1
        %s325 = smul.addr %s324, 4
        %s326 = smul.addr %s325, 4
        %s327 = scalar_lea.vmem %s5, %s326
        %p328 = pneg %p156
        %p329 = pneg %p153
        %p330 = scmp.lt.s32.totalorder %s20, 1
        %s331 = scalar_select %p330, %s20, 1
        %s332 = smul.addr %s331, 8
        %s333 = smul.addr %s332, 4
        %s334 = scalar_lea.vmem %s6, %s333
        %p335 = pneg %p182
        %p336 = pneg %p179
        %p337 = scmp.lt.s32.totalorder %s20, 1
        %s338 = scalar_select %p337, %s20, 1
        %s339 = smul.addr %s338, 8
        %s340 = scalar_lea.vmem %s7, %s339
        %p341 = pneg %p208
        %p342 = pneg %p205
        %p343 = pneg %p229
        %p344 = pneg %p226
        %p345 = scmp.lt.s32.totalorder %s20, 1
        %s346 = scalar_select %p345, %s20, 1
        %s347 = smul.addr %s346, 4
        %s348 = smul.addr %s347, 4
        %s349 = scalar_lea.vmem %s3, %s348
        %p350 = scmp.lt.s32.totalorder %s20, 1
        %s351 = scalar_select %p350, %s20, 1
        %s352 = smul.addr %s351, 4
        %s353 = smul.addr %s352, 4
        %s354 = scalar_lea.vmem %s4, %s353
        %p355 = scmp.lt.s32.totalorder %s20, 1
        %s356 = scalar_select %p355, %s20, 1
        %s357 = smul.addr %s356, 4
        %s358 = smul.addr %s357, 4
        %s359 = scalar_lea.vmem %s5, %s358
        %p360 = scmp.lt.s32.totalorder %s20, 1
        %s361 = scalar_select %p360, %s20, 1
        %s362 = smul.addr %s361, 8
        %s363 = smul.addr %s362, 4
        %s364 = scalar_lea.vmem %s6, %s363
        %p365 = scmp.lt.s32.totalorder %s20, 1
        %s366 = scalar_select %p365, %s20, 1
        %s367 = smul.addr %s366, 8
        %s368 = scalar_lea.vmem %s7, %s367
        %p370 = scmp.eq.s32.totalorder %s20, 0
        // Predicated region
        $region53: #{bert_entail_cls_forward.1} parent=51 // pred_check
          %p371 = pneg %p370
        $region54: #{bert_entail_cls_forward.1} parent=51 // pred_check_branch
          %373 = sbr.rel (%p371) target = $region56
        $region55: #{bert_entail_cls_forward.1} parent=51 // pred_region
          %v374 = vld [vmem:[%s0] sm:$0xff]
          %v375 = vld [vmem:[%s0 + $0x8] sm:$0xff]
          %v376 = vld [vmem:[%s2] sm:$0x1]
          %v377 = vld [vmem:[%s2 + $0x1] sm:$0x1]
          %vm378 = vcmask 261120
          %v379 = vsel %vm378, %v374, 0.0
          %380 = vadd.xlane.f32.xlu0 %v379
          %v381 = vpop.xlane.xlu0 %380
          %v382 = vsel %vm378, %v375, 0.0
          %383 = vadd.xlane.f32.xlu0 %v382
          %v384 = vpop.xlane.xlu0 %383
          %v385 = vrcp.pop 32.0
          %v386 = vmul.f32 %v381, %v385
          %v387 = vmul.f32 %v384, %v385
          %v388 = vsub.f32 %v374, %v386
          %v389 = vsub.f32 %v375, %v387
          %v390 = vmul.f32 %v388, %v388
          %v391 = vmul.f32 %v389, %v389
          %v392 = vsel %vm378, %v390, 0.0
          %393 = vadd.xlane.f32.xlu0 %v392
          %v394 = vpop.xlane.xlu0 %393
          %v395 = vsel %vm378, %v391, 0.0
          %396 = vadd.xlane.f32.xlu0 %v395
          %v397 = vpop.xlane.xlu0 %396
          %v398 = vmul.f32 %v394, %v385
          %v399 = vmul.f32 %v397, %v385
          %v400 = vadd.f32 %v398, 1e-12
          %v401 = vadd.f32 %v399, 1e-12
          %v402 = vrsqrt.pop %v400
          %v403 = vrsqrt.pop %v401
          %v404 = vmul.f32 %v388, %v402
          %v405 = vmul.f32 %v389, %v403
          %v406 = vlaneseq
          %v407 = vshrl.u32 %v406, 7
          %v408 = vsub.s32 0, %v407
          %v409 = vrot.slane %v376, %v408
          %v410 = vmul.f32 %v404, %v409
          %v411 = vmul.f32 %v405, %v409
          %v412 = vlaneseq
          %v413 = vshrl.u32 %v412, 7
          %v414 = vsub.s32 0, %v413
          %v415 = vrot.slane %v377, %v414
          %v416 = vadd.f32 %v410, %v415
          %v417 = vadd.f32 %v411, %v415
          %418 = vst.msk [vmem:[#allocation2] sm:$0xff] %vm378, %v416
          %419 = vst.msk [vmem:[#allocation2 + $0x8] sm:$0xff] %vm378, %v417
        $region56: #{bert_entail_cls_forward.1} parent=51 // pred_fallthru
          _
        %v420 = vld [vmem:[#allocation2] sm:$0xff]
        %v421 = vld [vmem:[#allocation2 + $0x8] sm:$0xff]
        %v422 = vpack.c.bf16 %v421, %v420
        %v423 = vld [vmem:[%s368] sm:$0xff]
        %v424 = vld [vmem:[%s349] sm:$0xf]
        %v425 = vld [vmem:[%s349 + $0x4] sm:$0xf]
        %v426 = vld [vmem:[%s349 + $0x8] sm:$0xf]
        %v427 = vld [vmem:[%s349 + $0xc] sm:$0xf]
        %v428 = vlaneseq
        %v429 = vshrl.u32 %v428, 7
        %v430 = vsub.s32 0, %v429
        %v431 = vrot.slane %v423, %v430
        %v436 = vunpack.c.l.b16 %v424
        %v437 = vunpack.c.l.b16 %v425
        %v438 = vunpack.c.l.b16 %v426
        %v439 = vunpack.c.l.b16 %v427
        %v440 = vpack.c.b16 %v437, %v436
        %v441 = vpack.c.b16 %v439, %v438
        %vm444 = vcmask 261120
        %v446 = vsel %vm444, %v422, 0
        %448 = vmatprep.subr.bf16.mxu0 0
        %449 = vmatpush1.bf16.msra.mxu0 0
        %450 = vmatprep.subr.bf16.mxu0 0
        %451 = vmatpush1.bf16.msra.mxu0 0
        %452 = vmatprep.subr.bf16.mxu0 0
        %453 = vmatpush1.bf16.msra.mxu0 0
        %454 = vmatprep.subr.bf16.mxu0 0
        %455 = vmatpush1.bf16.msra.mxu0 0
        %456 = vmatprep.subr.bf16.mxu0 0
        %457 = vmatpush1.bf16.msra.mxu0 0
        %458 = vmatprep.subr.bf16.mxu0 0
        %459 = vmatpush1.bf16.msra.mxu0 0
        %460 = vmatprep.subr.bf16.mxu0 0
        %461 = vmatpush1.bf16.msra.mxu0 %v441
        %462 = vmatprep.subr.bf16.mxu0 0
        %463 = vmatpush1.bf16.msra.mxu0 %v440
        %464 = vmatprep.subr.bf16.mxu0 0
        %465 = vmatpush2.bf16.msra.mxu0 0
        %466 = vmatprep.subr.bf16.mxu0 0
        %467 = vmatpush2.bf16.msra.mxu0 0
        %468 = vmatprep.subr.bf16.mxu0 0
        %469 = vmatpush2.bf16.msra.mxu0 0
        %470 = vmatprep.subr.bf16.mxu0 0
        %471 = vmatpush2.bf16.msra.mxu0 0
        %472 = vmatprep.subr.bf16.mxu0 0
        %473 = vmatpush2.bf16.msra.mxu0 0
        %474 = vmatprep.subr.bf16.mxu0 0
        %475 = vmatpush2.bf16.msra.mxu0 0
        %476 = vmatprep.subr.bf16.mxu0 0
        %477 = vmatpush2.bf16.msra.mxu0 0
        %478 = vmatprep.subr.bf16.mxu0 0
        %479 = vmatpush2.bf16.msra.mxu0 0
        %480 = vmatprep.mubr.bf16.mxu0 0
        %481 = vmatmul.mubr.bf16.gmra.mxu0 %v446
        %v482 = vpop.f32.mrf.mxu0
        %v483 = vadd.f32 %v431, %v482
        %v484 = vpop.f32.mrf.mxu0
        %v485 = vpop.f32.mrf.mxu0
        %v486 = vadd.f32 %v431, %v485
        %v487 = vpop.f32.mrf.mxu0
        %488 = vdwg.mxu0
        %v489 = vld [vmem:[%s1] sm:$0x1]
        %v490 = vld [vmem:[%s1 + $0x1] sm:$0x1]
        %v491 = vpack.c.bf16 %v483, %v483
        %v492 = vpack.c.bf16 %v486, %v486
        %v495 = vlaneseq
        %v496 = vshrl.u32 %v495, 7
        %v497 = vsub.s32 0, %v496
        %v498 = vrot.slane %v489, %v497
        %v499 = vlaneseq
        %v500 = vshrl.u32 %v499, 7
        %v501 = vsub.s32 0, %v500
        %v502 = vrot.slane %v490, %v501
        %506 = vrot.lane.b32.xlu0 %v491, 96
        %v507 = vpop.permute.xlu0 %506
        %vm508 = vcmask 130048
        %v510 = vsel %vm508, %v491, 0
        %v513 = vsel %vm508, %v507, 0
        %515 = vmatprep.subr.bf16.mxu0 0
        %516 = vmatpush1.bf16.xpose.msra.mxu0 0
        %517 = vmatprep.subr.bf16.mxu0 0
        %518 = vmatpush1.bf16.xpose.msra.mxu0 0
        %519 = vmatprep.subr.bf16.mxu0 0
        %520 = vmatpush1.bf16.xpose.msra.mxu0 0
        %521 = vmatprep.subr.bf16.mxu0 0
        %522 = vmatpush1.bf16.xpose.msra.mxu0 0
        %523 = vmatprep.subr.bf16.mxu0 0
        %524 = vmatpush1.bf16.xpose.msra.mxu0 0
        %525 = vmatprep.subr.bf16.mxu0 0
        %526 = vmatpush1.bf16.xpose.msra.mxu0 0
        %527 = vmatprep.subr.bf16.mxu0 0
        %528 = vmatpush1.bf16.xpose.msra.mxu0 0
        %529 = vmatprep.subr.bf16.mxu0 0
        %530 = vmatpush1.bf16.xpose.msra.mxu0 %v513
        %531 = vmatprep.subr.bf16.mxu0 0
        %532 = vmatpush2.bf16.xpose.msra.mxu0 0
        %533 = vmatprep.subr.bf16.mxu0 0
        %534 = vmatpush2.bf16.xpose.msra.mxu0 0
        %535 = vmatprep.subr.bf16.mxu0 0
        %536 = vmatpush2.bf16.xpose.msra.mxu0 0
        %537 = vmatprep.subr.bf16.mxu0 0
        %538 = vmatpush2.bf16.xpose.msra.mxu0 0
        %539 = vmatprep.subr.bf16.mxu0 0
        %540 = vmatpush2.bf16.xpose.msra.mxu0 0
        %541 = vmatprep.subr.bf16.mxu0 0
        %542 = vmatpush2.bf16.xpose.msra.mxu0 0
        %543 = vmatprep.subr.bf16.mxu0 0
        %544 = vmatpush2.bf16.xpose.msra.mxu0 0
        %545 = vmatprep.subr.bf16.mxu0 0
        %546 = vmatpush2.bf16.xpose.msra.mxu0 0
        %547 = vmatprep.mubr.bf16.mxu0 0
        %548 = vmatmul.mubr.bf16.gmra.mxu0 %v510
        %v549 = vpop.f32.mrf.mxu0
        %v550 = vadd.f32 %v498, %v549
        %v551 = vpop.f32.mrf.mxu0
        %v552 = vpop.f32.mrf.mxu0
        %v553 = vpop.f32.mrf.mxu0
        %554 = vdwg.mxu0
        %556 = vrot.lane.b32.xlu0 %v492, 96
        %v557 = vpop.permute.xlu0 %556
        %v559 = vsel %vm508, %v492, 0
        %v562 = vsel %vm508, %v557, 0
        %564 = vmatprep.subr.bf16.mxu0 0
        %565 = vmatpush1.bf16.xpose.msra.mxu0 0
        %566 = vmatprep.subr.bf16.mxu0 0
        %567 = vmatpush1.bf16.xpose.msra.mxu0 0
        %568 = vmatprep.subr.bf16.mxu0 0
        %569 = vmatpush1.bf16.xpose.msra.mxu0 0
        %570 = vmatprep.subr.bf16.mxu0 0
        %571 = vmatpush1.bf16.xpose.msra.mxu0 0
        %572 = vmatprep.subr.bf16.mxu0 0
        %573 = vmatpush1.bf16.xpose.msra.mxu0 0
        %574 = vmatprep.subr.bf16.mxu0 0
        %575 = vmatpush1.bf16.xpose.msra.mxu0 0
        %576 = vmatprep.subr.bf16.mxu0 0
        %577 = vmatpush1.bf16.xpose.msra.mxu0 0
        %578 = vmatprep.subr.bf16.mxu0 0
        %579 = vmatpush1.bf16.xpose.msra.mxu0 %v562
        %580 = vmatprep.subr.bf16.mxu0 0
        %581 = vmatpush2.bf16.xpose.msra.mxu0 0
        %582 = vmatprep.subr.bf16.mxu0 0
        %583 = vmatpush2.bf16.xpose.msra.mxu0 0
        %584 = vmatprep.subr.bf16.mxu0 0
        %585 = vmatpush2.bf16.xpose.msra.mxu0 0
        %586 = vmatprep.subr.bf16.mxu0 0
        %587 = vmatpush2.bf16.xpose.msra.mxu0 0
        %588 = vmatprep.subr.bf16.mxu0 0
        %589 = vmatpush2.bf16.xpose.msra.mxu0 0
        %590 = vmatprep.subr.bf16.mxu0 0
        %591 = vmatpush2.bf16.xpose.msra.mxu0 0
        %592 = vmatprep.subr.bf16.mxu0 0
        %593 = vmatpush2.bf16.xpose.msra.mxu0 0
        %594 = vmatprep.subr.bf16.mxu0 0
        %595 = vmatpush2.bf16.xpose.msra.mxu0 0
        %596 = vmatprep.mubr.bf16.mxu0 0
        %597 = vmatmul.mubr.bf16.gmra.mxu0 %v559
        %v598 = vpop.f32.mrf.mxu0
        %v599 = vadd.f32 %v502, %v598
        %v600 = vpop.f32.mrf.mxu0
        %v601 = vpop.f32.mrf.mxu0
        %v602 = vpop.f32.mrf.mxu0
        %603 = vdwg.mxu0
        %vm604 = vcmask 64512
        %v605 = vsel %vm604, %v550, -inf
        %606 = vmax.xlane.f32.xlu0 %v605
        %v607 = vpop.xlane.xlu0 %606
        %v608 = vsel %vm604, %v599, -inf
        %609 = vmax.xlane.f32.xlu0 %v608
        %v610 = vpop.xlane.xlu0 %609
        %v611 = vsub.f32 %v550, %v607
        %v612 = vsub.f32 %v599, %v610
        %v613 = vmul.f32 %v611, 1.442695
        %v614 = vpow.pop %v613
        %v615 = vmul.f32 %v612, 1.442695
        %v616 = vpow.pop %v615
        %v617 = vsel %vm604, %v614, 0.0
        %618 = vadd.xlane.f32.xlu0 %v617
        %v619 = vpop.xlane.xlu0 %618
        %v620 = vsel %vm604, %v616, 0.0
        %621 = vadd.xlane.f32.xlu0 %v620
        %v622 = vpop.xlane.xlu0 %621
        %v623 = vrcp.pop %v619
        %v624 = vrcp.pop %v622
        %v625 = vmul.f32 %v614, %v623
        %v626 = vmul.f32 %v616, %v624
        %v627 = vpack.c.bf16 %v625, %v625
        %v628 = vpack.c.bf16 %v626, %v626
        %629 = vrot.lane.b32.xlu0 %v491, 64
        %v630 = vpop.permute.xlu0 %629
        %v632 = vsel %vm604, %v627, 0
        %vm634 = vcmask 1043456
        %v636 = vsel %vm634, %v630, 0
        %638 = vmatprep.subr.bf16.mxu0 0
        %639 = vmatpush1.bf16.msra.mxu0 0
        %640 = vmatprep.subr.bf16.mxu0 0
        %641 = vmatpush1.bf16.msra.mxu0 0
        %642 = vmatprep.subr.bf16.mxu0 0
        %643 = vmatpush1.bf16.msra.mxu0 0
        %644 = vmatprep.subr.bf16.mxu0 0
        %645 = vmatpush1.bf16.msra.mxu0 0
        %646 = vmatprep.subr.bf16.mxu0 0
        %647 = vmatpush1.bf16.msra.mxu0 0
        %648 = vmatprep.subr.bf16.mxu0 0
        %649 = vmatpush1.bf16.msra.mxu0 0
        %650 = vmatprep.subr.bf16.mxu0 0
        %651 = vmatpush1.bf16.msra.mxu0 0
        %652 = vmatprep.subr.bf16.mxu0 0
        %653 = vmatpush1.bf16.msra.mxu0 %v636
        %654 = vmatprep.subr.bf16.mxu0 0
        %655 = vmatpush2.bf16.msra.mxu0 0
        %656 = vmatprep.subr.bf16.mxu0 0
        %657 = vmatpush2.bf16.msra.mxu0 0
        %658 = vmatprep.subr.bf16.mxu0 0
        %659 = vmatpush2.bf16.msra.mxu0 0
        %660 = vmatprep.subr.bf16.mxu0 0
        %661 = vmatpush2.bf16.msra.mxu0 0
        %662 = vmatprep.subr.bf16.mxu0 0
        %663 = vmatpush2.bf16.msra.mxu0 0
        %664 = vmatprep.subr.bf16.mxu0 0
        %665 = vmatpush2.bf16.msra.mxu0 0
        %666 = vmatprep.subr.bf16.mxu0 0
        %667 = vmatpush2.bf16.msra.mxu0 0
        %668 = vmatprep.subr.bf16.mxu0 0
        %669 = vmatpush2.bf16.msra.mxu0 0
        %670 = vmatprep.mubr.bf16.mxu0 0
        %671 = vmatmul.mubr.bf16.gmra.mxu0 %v632
        %v672 = vpop.f32.mrf.mxu0
        %v673 = vadd.f32 0.0, %v672
        %v674 = vpop.f32.mrf.mxu0
        %v675 = vpop.f32.mrf.mxu0
        %v676 = vpop.f32.mrf.mxu0
        %677 = vdwg.mxu0
        %678 = vrot.lane.b32.xlu0 %v492, 64
        %v679 = vpop.permute.xlu0 %678
        %v681 = vsel %vm604, %v628, 0
        %v684 = vsel %vm634, %v679, 0
        %686 = vmatprep.subr.bf16.mxu0 0
        %687 = vmatpush1.bf16.msra.mxu0 0
        %688 = vmatprep.subr.bf16.mxu0 0
        %689 = vmatpush1.bf16.msra.mxu0 0
        %690 = vmatprep.subr.bf16.mxu0 0
        %691 = vmatpush1.bf16.msra.mxu0 0
        %692 = vmatprep.subr.bf16.mxu0 0
        %693 = vmatpush1.bf16.msra.mxu0 0
        %694 = vmatprep.subr.bf16.mxu0 0
        %695 = vmatpush1.bf16.msra.mxu0 0
        %696 = vmatprep.subr.bf16.mxu0 0
        %697 = vmatpush1.bf16.msra.mxu0 0
        %698 = vmatprep.subr.bf16.mxu0 0
        %699 = vmatpush1.bf16.msra.mxu0 0
        %700 = vmatprep.subr.bf16.mxu0 0
        %701 = vmatpush1.bf16.msra.mxu0 %v684
        %702 = vmatprep.subr.bf16.mxu0 0
        %703 = vmatpush2.bf16.msra.mxu0 0
        %704 = vmatprep.subr.bf16.mxu0 0
        %705 = vmatpush2.bf16.msra.mxu0 0
        %706 = vmatprep.subr.bf16.mxu0 0
        %707 = vmatpush2.bf16.msra.mxu0 0
        %708 = vmatprep.subr.bf16.mxu0 0
        %709 = vmatpush2.bf16.msra.mxu0 0
        %710 = vmatprep.subr.bf16.mxu0 0
        %711 = vmatpush2.bf16.msra.mxu0 0
        %712 = vmatprep.subr.bf16.mxu0 0
        %713 = vmatpush2.bf16.msra.mxu0 0
        %714 = vmatprep.subr.bf16.mxu0 0
        %715 = vmatpush2.bf16.msra.mxu0 0
        %716 = vmatprep.subr.bf16.mxu0 0
        %717 = vmatpush2.bf16.msra.mxu0 0
        %718 = vmatprep.mubr.bf16.mxu0 0
        %719 = vmatmul.mubr.bf16.gmra.mxu0 %v681
        %v720 = vpop.f32.mrf.mxu0
        %v721 = vadd.f32 0.0, %v720
        %v722 = vpop.f32.mrf.mxu0
        %v723 = vpop.f32.mrf.mxu0
        %v724 = vpop.f32.mrf.mxu0
        %725 = vdwg.mxu0
        %726 = vrot.lane.b32.xlu0 %v491, 112
        %v727 = vpop.permute.xlu0 %726
        %728 = vrot.lane.b32.xlu0 %v491, 80
        %v729 = vpop.permute.xlu0 %728
        %v731 = vsel %vm508, %v727, 0
        %v734 = vsel %vm508, %v729, 0
        %736 = vmatprep.subr.bf16.mxu0 0
        %737 = vmatpush1.bf16.xpose.msra.mxu0 0
        %738 = vmatprep.subr.bf16.mxu0 0
        %739 = vmatpush1.bf16.xpose.msra.mxu0 0
        %740 = vmatprep.subr.bf16.mxu0 0
        %741 = vmatpush1.bf16.xpose.msra.mxu0 0
        %742 = vmatprep.subr.bf16.mxu0 0
        %743 = vmatpush1.bf16.xpose.msra.mxu0 0
        %744 = vmatprep.subr.bf16.mxu0 0
        %745 = vmatpush1.bf16.xpose.msra.mxu0 0
        %746 = vmatprep.subr.bf16.mxu0 0
        %747 = vmatpush1.bf16.xpose.msra.mxu0 0
        %748 = vmatprep.subr.bf16.mxu0 0
        %749 = vmatpush1.bf16.xpose.msra.mxu0 0
        %750 = vmatprep.subr.bf16.mxu0 0
        %751 = vmatpush1.bf16.xpose.msra.mxu0 %v734
        %752 = vmatprep.subr.bf16.mxu0 0
        %753 = vmatpush2.bf16.xpose.msra.mxu0 0
        %754 = vmatprep.subr.bf16.mxu0 0
        %755 = vmatpush2.bf16.xpose.msra.mxu0 0
        %756 = vmatprep.subr.bf16.mxu0 0
        %757 = vmatpush2.bf16.xpose.msra.mxu0 0
        %758 = vmatprep.subr.bf16.mxu0 0
        %759 = vmatpush2.bf16.xpose.msra.mxu0 0
        %760 = vmatprep.subr.bf16.mxu0 0
        %761 = vmatpush2.bf16.xpose.msra.mxu0 0
        %762 = vmatprep.subr.bf16.mxu0 0
        %763 = vmatpush2.bf16.xpose.msra.mxu0 0
        %764 = vmatprep.subr.bf16.mxu0 0
        %765 = vmatpush2.bf16.xpose.msra.mxu0 0
        %766 = vmatprep.subr.bf16.mxu0 0
        %767 = vmatpush2.bf16.xpose.msra.mxu0 0
        %768 = vmatprep.mubr.bf16.mxu0 0
        %769 = vmatmul.mubr.bf16.gmra.mxu0 %v731
        %v770 = vpop.f32.mrf.mxu0
        %v771 = vadd.f32 %v498, %v770
        %v772 = vpop.f32.mrf.mxu0
        %v773 = vpop.f32.mrf.mxu0
        %v774 = vpop.f32.mrf.mxu0
        %775 = vdwg.mxu0
        %776 = vrot.lane.b32.xlu0 %v492, 112
        %v777 = vpop.permute.xlu0 %776
        %778 = vrot.lane.b32.xlu0 %v492, 80
        %v779 = vpop.permute.xlu0 %778
        %v781 = vsel %vm508, %v777, 0
        %v784 = vsel %vm508, %v779, 0
        %786 = vmatprep.subr.bf16.mxu0 0
        %787 = vmatpush1.bf16.xpose.msra.mxu0 0
        %788 = vmatprep.subr.bf16.mxu0 0
        %789 = vmatpush1.bf16.xpose.msra.mxu0 0
        %790 = vmatprep.subr.bf16.mxu0 0
        %791 = vmatpush1.bf16.xpose.msra.mxu0 0
        %792 = vmatprep.subr.bf16.mxu0 0
        %793 = vmatpush1.bf16.xpose.msra.mxu0 0
        %794 = vmatprep.subr.bf16.mxu0 0
        %795 = vmatpush1.bf16.xpose.msra.mxu0 0
        %796 = vmatprep.subr.bf16.mxu0 0
        %797 = vmatpush1.bf16.xpose.msra.mxu0 0
        %798 = vmatprep.subr.bf16.mxu0 0
        %799 = vmatpush1.bf16.xpose.msra.mxu0 0
        %800 = vmatprep.subr.bf16.mxu0 0
        %801 = vmatpush1.bf16.xpose.msra.mxu0 %v784
        %802 = vmatprep.subr.bf16.mxu0 0
        %803 = vmatpush2.bf16.xpose.msra.mxu0 0
        %804 = vmatprep.subr.bf16.mxu0 0
        %805 = vmatpush2.bf16.xpose.msra.mxu0 0
        %806 = vmatprep.subr.bf16.mxu0 0
        %807 = vmatpush2.bf16.xpose.msra.mxu0 0
        %808 = vmatprep.subr.bf16.mxu0 0
        %809 = vmatpush2.bf16.xpose.msra.mxu0 0
        %810 = vmatprep.subr.bf16.mxu0 0
        %811 = vmatpush2.bf16.xpose.msra.mxu0 0
        %812 = vmatprep.subr.bf16.mxu0 0
        %813 = vmatpush2.bf16.xpose.msra.mxu0 0
        %814 = vmatprep.subr.bf16.mxu0 0
        %815 = vmatpush2.bf16.xpose.msra.mxu0 0
        %816 = vmatprep.subr.bf16.mxu0 0
        %817 = vmatpush2.bf16.xpose.msra.mxu0 0
        %818 = vmatprep.mubr.bf16.mxu0 0
        %819 = vmatmul.mubr.bf16.gmra.mxu0 %v781
        %v820 = vpop.f32.mrf.mxu0
        %v821 = vadd.f32 %v502, %v820
        %v822 = vpop.f32.mrf.mxu0
        %v823 = vpop.f32.mrf.mxu0
        %v824 = vpop.f32.mrf.mxu0
        %825 = vdwg.mxu0
        %v826 = vsel %vm604, %v771, -inf
        %827 = vmax.xlane.f32.xlu0 %v826
        %v828 = vpop.xlane.xlu0 %827
        %v829 = vsel %vm604, %v821, -inf
        %830 = vmax.xlane.f32.xlu0 %v829
        %v831 = vpop.xlane.xlu0 %830
        %v832 = vsub.f32 %v771, %v828
        %v833 = vsub.f32 %v821, %v831
        %v834 = vmul.f32 %v832, 1.442695
        %v835 = vpow.pop %v834
        %v836 = vmul.f32 %v833, 1.442695
        %v837 = vpow.pop %v836
        %v838 = vsel %vm604, %v835, 0.0
        %839 = vadd.xlane.f32.xlu0 %v838
        %v840 = vpop.xlane.xlu0 %839
        %v841 = vsel %vm604, %v837, 0.0
        %842 = vadd.xlane.f32.xlu0 %v841
        %v843 = vpop.xlane.xlu0 %842
        %v844 = vrcp.pop %v840
        %v845 = vrcp.pop %v843
        %v846 = vmul.f32 %v835, %v844
        %v847 = vmul.f32 %v837, %v845
        %v848 = vpack.c.bf16 %v846, %v846
        %v849 = vpack.c.bf16 %v847, %v847
        %850 = vrot.lane.b32.xlu0 %v491, 48
        %v851 = vpop.permute.xlu0 %850
        %v853 = vsel %vm604, %v848, 0
        %v856 = vsel %vm634, %v851, 0
        %858 = vmatprep.subr.bf16.mxu0 0
        %859 = vmatpush1.bf16.msra.mxu0 0
        %860 = vmatprep.subr.bf16.mxu0 0
        %861 = vmatpush1.bf16.msra.mxu0 0
        %862 = vmatprep.subr.bf16.mxu0 0
        %863 = vmatpush1.bf16.msra.mxu0 0
        %864 = vmatprep.subr.bf16.mxu0 0
        %865 = vmatpush1.bf16.msra.mxu0 0
        %866 = vmatprep.subr.bf16.mxu0 0
        %867 = vmatpush1.bf16.msra.mxu0 0
        %868 = vmatprep.subr.bf16.mxu0 0
        %869 = vmatpush1.bf16.msra.mxu0 0
        %870 = vmatprep.subr.bf16.mxu0 0
        %871 = vmatpush1.bf16.msra.mxu0 0
        %872 = vmatprep.subr.bf16.mxu0 0
        %873 = vmatpush1.bf16.msra.mxu0 %v856
        %874 = vmatprep.subr.bf16.mxu0 0
        %875 = vmatpush2.bf16.msra.mxu0 0
        %876 = vmatprep.subr.bf16.mxu0 0
        %877 = vmatpush2.bf16.msra.mxu0 0
        %878 = vmatprep.subr.bf16.mxu0 0
        %879 = vmatpush2.bf16.msra.mxu0 0
        %880 = vmatprep.subr.bf16.mxu0 0
        %881 = vmatpush2.bf16.msra.mxu0 0
        %882 = vmatprep.subr.bf16.mxu0 0
        %883 = vmatpush2.bf16.msra.mxu0 0
        %884 = vmatprep.subr.bf16.mxu0 0
        %885 = vmatpush2.bf16.msra.mxu0 0
        %886 = vmatprep.subr.bf16.mxu0 0
        %887 = vmatpush2.bf16.msra.mxu0 0
        %888 = vmatprep.subr.bf16.mxu0 0
        %889 = vmatpush2.bf16.msra.mxu0 0
        %890 = vmatprep.mubr.bf16.mxu0 0
        %891 = vmatmul.mubr.bf16.gmra.mxu0 %v853
        %v892 = vpop.f32.mrf.mxu0
        %v893 = vadd.f32 0.0, %v892
        %v894 = vpop.f32.mrf.mxu0
        %v895 = vpop.f32.mrf.mxu0
        %v896 = vpop.f32.mrf.mxu0
        %897 = vdwg.mxu0
        %898 = vrot.lane.b32.xlu0 %v492, 48
        %v899 = vpop.permute.xlu0 %898
        %v901 = vsel %vm604, %v849, 0
        %v904 = vsel %vm634, %v899, 0
        %906 = vmatprep.subr.bf16.mxu0 0
        %907 = vmatpush1.bf16.msra.mxu0 0
        %908 = vmatprep.subr.bf16.mxu0 0
        %909 = vmatpush1.bf16.msra.mxu0 0
        %910 = vmatprep.subr.bf16.mxu0 0
        %911 = vmatpush1.bf16.msra.mxu0 0
        %912 = vmatprep.subr.bf16.mxu0 0
        %913 = vmatpush1.bf16.msra.mxu0 0
        %914 = vmatprep.subr.bf16.mxu0 0
        %915 = vmatpush1.bf16.msra.mxu0 0
        %916 = vmatprep.subr.bf16.mxu0 0
        %917 = vmatpush1.bf16.msra.mxu0 0
        %918 = vmatprep.subr.bf16.mxu0 0
        %919 = vmatpush1.bf16.msra.mxu0 0
        %920 = vmatprep.subr.bf16.mxu0 0
        %921 = vmatpush1.bf16.msra.mxu0 %v904
        %922 = vmatprep.subr.bf16.mxu0 0
        %923 = vmatpush2.bf16.msra.mxu0 0
        %924 = vmatprep.subr.bf16.mxu0 0
        %925 = vmatpush2.bf16.msra.mxu0 0
        %926 = vmatprep.subr.bf16.mxu0 0
        %927 = vmatpush2.bf16.msra.mxu0 0
        %928 = vmatprep.subr.bf16.mxu0 0
        %929 = vmatpush2.bf16.msra.mxu0 0
        %930 = vmatprep.subr.bf16.mxu0 0
        %931 = vmatpush2.bf16.msra.mxu0 0
        %932 = vmatprep.subr.bf16.mxu0 0
        %933 = vmatpush2.bf16.msra.mxu0 0
        %934 = vmatprep.subr.bf16.mxu0 0
        %935 = vmatpush2.bf16.msra.mxu0 0
        %936 = vmatprep.subr.bf16.mxu0 0
        %937 = vmatpush2.bf16.msra.mxu0 0
        %938 = vmatprep.mubr.bf16.mxu0 0
        %939 = vmatmul.mubr.bf16.gmra.mxu0 %v901
        %v940 = vpop.f32.mrf.mxu0
        %v941 = vadd.f32 0.0, %v940
        %v942 = vpop.f32.mrf.mxu0
        %v943 = vpop.f32.mrf.mxu0
        %v944 = vpop.f32.mrf.mxu0
        %945 = vdwg.mxu0
        %948 = vrot.lane.b32.xlu0 %v893, 16
        %v949 = vpop.permute.xlu0 %948
        %950 = vrot.lane.b32.xlu0 %v941, 16
        %v951 = vpop.permute.xlu0 %950
        %v954 = vsel %vm508, %v673, %v949
        %v955 = vsel %vm508, %v721, %v951
        %v956 = vpack.c.bf16 %v955, %v954
        %v957 = vld [vmem:[%s354] sm:$0xf]
        %v958 = vld [vmem:[%s354 + $0x4] sm:$0xf]
        %v959 = vld [vmem:[%s354 + $0x8] sm:$0xf]
        %v960 = vld [vmem:[%s354 + $0xc] sm:$0xf]
        %v961 = vlaneseq
        %v962 = vshrl.u32 %v961, 7
        %v963 = vsub.s32 1, %v962
        %v964 = vrot.slane %v423, %v963
        %v969 = vunpack.c.l.b16 %v957
        %v970 = vunpack.c.l.b16 %v958
        %v971 = vunpack.c.l.b16 %v959
        %v972 = vunpack.c.l.b16 %v960
        %v973 = vpack.c.b16 %v970, %v969
        %v974 = vpack.c.b16 %v972, %v971
        %v978 = vsel %vm444, %v956, 0
        %980 = vmatprep.subr.bf16.mxu0 0
        %981 = vmatpush1.bf16.msra.mxu0 0
        %982 = vmatprep.subr.bf16.mxu0 0
        %983 = vmatpush1.bf16.msra.mxu0 0
        %984 = vmatprep.subr.bf16.mxu0 0
        %985 = vmatpush1.bf16.msra.mxu0 0
        %986 = vmatprep.subr.bf16.mxu0 0
        %987 = vmatpush1.bf16.msra.mxu0 0
        %988 = vmatprep.subr.bf16.mxu0 0
        %989 = vmatpush1.bf16.msra.mxu0 0
        %990 = vmatprep.subr.bf16.mxu0 0
        %991 = vmatpush1.bf16.msra.mxu0 0
        %992 = vmatprep.subr.bf16.mxu0 0
        %993 = vmatpush1.bf16.msra.mxu0 %v974
        %994 = vmatprep.subr.bf16.mxu0 0
        %995 = vmatpush1.bf16.msra.mxu0 %v973
        %996 = vmatprep.subr.bf16.mxu0 0
        %997 = vmatpush2.bf16.msra.mxu0 0
        %998 = vmatprep.subr.bf16.mxu0 0
        %999 = vmatpush2.bf16.msra.mxu0 0
        %1000 = vmatprep.subr.bf16.mxu0 0
        %1001 = vmatpush2.bf16.msra.mxu0 0
        %1002 = vmatprep.subr.bf16.mxu0 0
        %1003 = vmatpush2.bf16.msra.mxu0 0
        %1004 = vmatprep.subr.bf16.mxu0 0
        %1005 = vmatpush2.bf16.msra.mxu0 0
        %1006 = vmatprep.subr.bf16.mxu0 0
        %1007 = vmatpush2.bf16.msra.mxu0 0
        %1008 = vmatprep.subr.bf16.mxu0 0
        %1009 = vmatpush2.bf16.msra.mxu0 0
        %1010 = vmatprep.subr.bf16.mxu0 0
        %1011 = vmatpush2.bf16.msra.mxu0 0
        %1012 = vmatprep.mubr.bf16.mxu0 0
        %1013 = vmatmul.mubr.bf16.gmra.mxu0 %v978
        %v1014 = vpop.f32.mrf.mxu0
        %v1015 = vadd.f32 %v964, %v1014
        %v1016 = vpop.f32.mrf.mxu0
        %v1017 = vpop.f32.mrf.mxu0
        %v1018 = vadd.f32 %v964, %v1017
        %v1019 = vpop.f32.mrf.mxu0
        %1020 = vdwg.mxu0
        %v1021 = vadd.f32 %v420, %v1015
        %v1022 = vadd.f32 %v421, %v1018
        %v1023 = vsel %vm444, %v1021, 0.0
        %1024 = vadd.xlane.f32.xlu0 %v1023
        %v1025 = vpop.xlane.xlu0 %1024
        %v1026 = vsel %vm444, %v1022, 0.0
        %1027 = vadd.xlane.f32.xlu0 %v1026
        %v1028 = vpop.xlane.xlu0 %1027
        %v1029 = vrcp.pop 32.0
        %v1030 = vmul.f32 %v1025, %v1029
        %v1031 = vmul.f32 %v1028, %v1029
        %v1032 = vsub.f32 %v1021, %v1030
        %v1033 = vsub.f32 %v1022, %v1031
        %v1034 = vmul.f32 %v1032, %v1032
        %v1035 = vmul.f32 %v1033, %v1033
        %v1036 = vsel %vm444, %v1034, 0.0
        %1037 = vadd.xlane.f32.xlu0 %v1036
        %v1038 = vpop.xlane.xlu0 %1037
        %v1039 = vsel %vm444, %v1035, 0.0
        %1040 = vadd.xlane.f32.xlu0 %v1039
        %v1041 = vpop.xlane.xlu0 %1040
        %v1042 = vmul.f32 %v1038, %v1029
        %v1043 = vmul.f32 %v1041, %v1029
        %v1044 = vadd.f32 %v1042, 1e-12
        %v1045 = vadd.f32 %v1043, 1e-12
        %v1046 = vrsqrt.pop %v1044
        %v1047 = vrsqrt.pop %v1045
        %v1048 = vmul.f32 %v1032, %v1046
        %v1049 = vmul.f32 %v1033, %v1047
        %v1050 = vlaneseq
        %v1051 = vshrl.u32 %v1050, 7
        %v1052 = vsub.s32 2, %v1051
        %v1053 = vrot.slane %v423, %v1052
        %v1054 = vmul.f32 %v1048, %v1053
        %v1055 = vmul.f32 %v1049, %v1053
        %v1056 = vlaneseq
        %v1057 = vshrl.u32 %v1056, 7
        %v1058 = vsub.s32 3, %v1057
        %v1059 = vrot.slane %v423, %v1058
        %v1060 = vadd.f32 %v1054, %v1059
        %v1061 = vadd.f32 %v1055, %v1059
        %v1062 = vpack.c.bf16 %v1061, %v1060
        %v1063 = vld [vmem:[%s359] sm:$0xf]
        %v1064 = vld [vmem:[%s359 + $0x4] sm:$0xf]
        %v1065 = vld [vmem:[%s359 + $0x8] sm:$0xf]
        %v1066 = vld [vmem:[%s359 + $0xc] sm:$0xf]
        %v1067 = vlaneseq
        %v1068 = vshrl.u32 %v1067, 7
        %v1069 = vsub.s32 4, %v1068
        %v1070 = vrot.slane %v423, %v1069
        %v1075 = vunpack.c.l.b16 %v1063
        %v1076 = vunpack.c.l.b16 %v1064
        %v1077 = vunpack.c.l.b16 %v1065
        %v1078 = vunpack.c.l.b16 %v1066
        %v1079 = vpack.c.b16 %v1076, %v1075
        %v1080 = vpack.c.b16 %v1078, %v1077
        %v1084 = vsel %vm444, %v1062, 0
        %1086 = vmatprep.subr.bf16.mxu0 0
        %1087 = vmatpush1.bf16.msra.mxu0 0
        %1088 = vmatprep.subr.bf16.mxu0 0
        %1089 = vmatpush1.bf16.msra.mxu0 0
        %1090 = vmatprep.subr.bf16.mxu0 0
        %1091 = vmatpush1.bf16.msra.mxu0 0
        %1092 = vmatprep.subr.bf16.mxu0 0
        %1093 = vmatpush1.bf16.msra.mxu0 0
        %1094 = vmatprep.subr.bf16.mxu0 0
        %1095 = vmatpush1.bf16.msra.mxu0 0
        %1096 = vmatprep.subr.bf16.mxu0 0
        %1097 = vmatpush1.bf16.msra.mxu0 0
        %1098 = vmatprep.subr.bf16.mxu0 0
        %1099 = vmatpush1.bf16.msra.mxu0 %v1080
        %1100 = vmatprep.subr.bf16.mxu0 0
        %1101 = vmatpush1.bf16.msra.mxu0 %v1079
        %1102 = vmatprep.subr.bf16.mxu0 0
        %1103 = vmatpush2.bf16.msra.mxu0 0
        %1104 = vmatprep.subr.bf16.mxu0 0
        %1105 = vmatpush2.bf16.msra.mxu0 0
        %1106 = vmatprep.subr.bf16.mxu0 0
        %1107 = vmatpush2.bf16.msra.mxu0 0
        %1108 = vmatprep.subr.bf16.mxu0 0
        %1109 = vmatpush2.bf16.msra.mxu0 0
        %1110 = vmatprep.subr.bf16.mxu0 0
        %1111 = vmatpush2.bf16.msra.mxu0 0
        %1112 = vmatprep.subr.bf16.mxu0 0
        %1113 = vmatpush2.bf16.msra.mxu0 0
        %1114 = vmatprep.subr.bf16.mxu0 0
        %1115 = vmatpush2.bf16.msra.mxu0 0
        %1116 = vmatprep.subr.bf16.mxu0 0
        %1117 = vmatpush2.bf16.msra.mxu0 0
        %1118 = vmatprep.mubr.bf16.mxu0 0
        %1119 = vmatmul.mubr.bf16.gmra.mxu0 %v1084
        %v1120 = vpop.f32.mrf.mxu0
        %v1121 = vadd.f32 %v1070, %v1120
        %v1122 = vpop.f32.mrf.mxu0
        %v1123 = vpop.f32.mrf.mxu0
        %v1124 = vadd.f32 %v1070, %v1123
        %v1125 = vpop.f32.mrf.mxu0
        %1126 = vdwg.mxu0
        %v1127 = vmul.f32 %v1121, %v1121
        %v1128 = vmul.f32 %v1124, %v1124
        %v1129 = vmul.f32 %v1121, %v1127
        %v1130 = vmul.f32 %v1124, %v1128
        %v1131 = vmul.f32 %v1129, 0.044715
        %v1132 = vmul.f32 %v1130, 0.044715
        %v1133 = vadd.f32 %v1121, %v1131
        %v1134 = vadd.f32 %v1124, %v1132
        %v1135 = vmul.f32 %v1133, 0.7978846
        %v1136 = vmul.f32 %v1134, 0.7978846
        %v1137 = vtanh.pop %v1135
        %v1138 = vtanh.pop %v1136
        %v1139 = vadd.f32 %v1137, 1.0
        %v1140 = vadd.f32 %v1138, 1.0
        %v1141 = vmul.f32 %v1139, 0.5
        %v1142 = vmul.f32 %v1140, 0.5
        %v1143 = vmul.f32 %v1121, %v1141
        %v1144 = vmul.f32 %v1124, %v1142
        %v1145 = vpack.c.bf16 %v1144, %v1143
        %v1146 = vld [vmem:[%s364] sm:$0xf]
        %v1147 = vld [vmem:[%s364 + $0x4] sm:$0xf]
        %v1148 = vld [vmem:[%s364 + $0x8] sm:$0xf]
        %v1149 = vld [vmem:[%s364 + $0xc] sm:$0xf]
        %v1150 = vld [vmem:[%s364 + $0x10] sm:$0xf]
        %v1151 = vld [vmem:[%s364 + $0x14] sm:$0xf]
        %v1152 = vld [vmem:[%s364 + $0x18] sm:$0xf]
        %v1153 = vld [vmem:[%s364 + $0x1c] sm:$0xf]
        %v1154 = vlaneseq
        %v1155 = vshrl.u32 %v1154, 7
        %v1156 = vsub.s32 5, %v1155
        %v1157 = vrot.slane %v423, %v1156
        %v1166 = vunpack.c.l.b16 %v1146
        %v1167 = vunpack.c.l.b16 %v1147
        %v1168 = vunpack.c.l.b16 %v1148
        %v1169 = vunpack.c.l.b16 %v1149
        %v1170 = vunpack.c.l.b16 %v1150
        %v1171 = vunpack.c.l.b16 %v1151
        %v1172 = vunpack.c.l.b16 %v1152
        %v1173 = vunpack.c.l.b16 %v1153
        %v1174 = vpack.c.b16 %v1167, %v1166
        %v1175 = vpack.c.b16 %v1169, %v1168
        %v1176 = vpack.c.b16 %v1171, %v1170
        %v1177 = vpack.c.b16 %v1173, %v1172
        %vm1182 = vcmask 523264
        %v1184 = vsel %vm1182, %v1145, 0
        %1186 = vmatprep.subr.bf16.mxu0 0
        %1187 = vmatpush1.bf16.msra.mxu0 0
        %1188 = vmatprep.subr.bf16.mxu0 0
        %1189 = vmatpush1.bf16.msra.mxu0 0
        %1190 = vmatprep.subr.bf16.mxu0 0
        %1191 = vmatpush1.bf16.msra.mxu0 0
        %1192 = vmatprep.subr.bf16.mxu0 0
        %1193 = vmatpush1.bf16.msra.mxu0 0
        %1194 = vmatprep.subr.bf16.mxu0 0
        %1195 = vmatpush1.bf16.msra.mxu0 %v1177
        %1196 = vmatprep.subr.bf16.mxu0 0
        %1197 = vmatpush1.bf16.msra.mxu0 %v1176
        %1198 = vmatprep.subr.bf16.mxu0 0
        %1199 = vmatpush1.bf16.msra.mxu0 %v1175
        %1200 = vmatprep.subr.bf16.mxu0 0
        %1201 = vmatpush1.bf16.msra.mxu0 %v1174
        %1202 = vmatprep.subr.bf16.mxu0 0
        %1203 = vmatpush2.bf16.msra.mxu0 0
        %1204 = vmatprep.subr.bf16.mxu0 0
        %1205 = vmatpush2.bf16.msra.mxu0 0
        %1206 = vmatprep.subr.bf16.mxu0 0
        %1207 = vmatpush2.bf16.msra.mxu0 0
        %1208 = vmatprep.subr.bf16.mxu0 0
        %1209 = vmatpush2.bf16.msra.mxu0 0
        %1210 = vmatprep.subr.bf16.mxu0 0
        %1211 = vmatpush2.bf16.msra.mxu0 0
        %1212 = vmatprep.subr.bf16.mxu0 0
        %1213 = vmatpush2.bf16.msra.mxu0 0
        %1214 = vmatprep.subr.bf16.mxu0 0
        %1215 = vmatpush2.bf16.msra.mxu0 0
        %1216 = vmatprep.subr.bf16.mxu0 0
        %1217 = vmatpush2.bf16.msra.mxu0 0
        %1218 = vmatprep.mubr.bf16.mxu0 0
        %1219 = vmatmul.mubr.bf16.gmra.mxu0 %v1184
        %v1220 = vpop.f32.mrf.mxu0
        %v1221 = vadd.f32 %v1157, %v1220
        %v1222 = vpop.f32.mrf.mxu0
        %v1223 = vpop.f32.mrf.mxu0
        %v1224 = vadd.f32 %v1157, %v1223
        %v1225 = vpop.f32.mrf.mxu0
        %1226 = vdwg.mxu0
        %v1227 = vadd.f32 %v1060, %v1221
        %v1228 = vadd.f32 %v1061, %v1224
        %v1229 = vsel %vm444, %v1227, 0.0
        %1230 = vadd.xlane.f32.xlu0 %v1229
        %v1231 = vpop.xlane.xlu0 %1230
        %v1232 = vsel %vm444, %v1228, 0.0
        %1233 = vadd.xlane.f32.xlu0 %v1232
        %v1234 = vpop.xlane.xlu0 %1233
        %v1235 = vmul.f32 %v1231, %v1029
        %v1236 = vmul.f32 %v1234, %v1029
        %v1237 = vsub.f32 %v1227, %v1235
        %v1238 = vsub.f32 %v1228, %v1236
        %v1239 = vmul.f32 %v1237, %v1237
        %v1240 = vmul.f32 %v1238, %v1238
        %v1241 = vsel %vm444, %v1239, 0.0
        %1242 = vadd.xlane.f32.xlu0 %v1241
        %v1243 = vpop.xlane.xlu0 %1242
        %v1244 = vsel %vm444, %v1240, 0.0
        %1245 = vadd.xlane.f32.xlu0 %v1244
        %v1246 = vpop.xlane.xlu0 %1245
        %v1247 = vmul.f32 %v1243, %v1029
        %v1248 = vmul.f32 %v1246, %v1029
        %v1249 = vadd.f32 %v1247, 1e-12
        %v1250 = vadd.f32 %v1248, 1e-12
        %v1251 = vrsqrt.pop %v1249
        %v1252 = vrsqrt.pop %v1250
        %v1253 = vmul.f32 %v1237, %v1251
        %v1254 = vmul.f32 %v1238, %v1252
        %v1255 = vlaneseq
        %v1256 = vshrl.u32 %v1255, 7
        %v1257 = vsub.s32 6, %v1256
        %v1258 = vrot.slane %v423, %v1257
        %v1259 = vmul.f32 %v1253, %v1258
        %v1260 = vmul.f32 %v1254, %v1258
        %v1261 = vlaneseq
        %v1262 = vshrl.u32 %v1261, 7
        %v1263 = vsub.s32 7, %v1262
        %v1264 = vrot.slane %v423, %v1263
        %v1265 = vadd.f32 %v1259, %v1264
        %v1266 = vadd.f32 %v1260, %v1264
        %1267 = vst.msk [vmem:[#allocation2] sm:$0xff] %vm444, %v1265
        %1268 = vst.msk [vmem:[#allocation2 + $0x8] sm:$0xff] %vm444, %v1266
        %p1269 = scmp.eq.s32.totalorder %s20, 1
        // Predicated region
        $region57: #{bert_entail_cls_forward.1} parent=51 // pred_check
          %p1270 = pneg %p1269
        $region58: #{bert_entail_cls_forward.1} parent=51 // pred_check_branch
          %1272 = sbr.rel (%p1270) target = $region60
        $region59: #{bert_entail_cls_forward.1} parent=51 // pred_region
          %vm1273 = vcmask 253952
          %1274 = vst.msk [vmem:[#allocation3] sm:$0x1] %vm1273, %v1265
          %1275 = vst.msk [vmem:[#allocation3 + $0x1] sm:$0x1] %vm1273, %v1266
        $region60: #{bert_entail_cls_forward.1} parent=51 // pred_fallthru
          _
        // Predicated region
        $region61: #{bert_entail_cls_forward.1} parent=51 // pred_check
          %p1276 = pneg %p226
        $region62: #{bert_entail_cls_forward.1} parent=51 // pred_check_branch
          %1278 = sbr.rel (%p1276) target = $region64
        $region63: #{bert_entail_cls_forward.1} parent=51 // pred_region
          %s1280 = ssub.s32 32, 32
          %1281 = vsyncadd [#allocation4], %s1280
          %s1282 = sshll.u32 [#allocation3], 4
          %s1283 = int_to_ptr.vmem [resolvable:$true] %s1282
          %1288 = dma.vmem_to_hbm [thread:$0]  %s1283, 32, %s8, [#allocation4], 16, 16, 1
        $region64: #{bert_entail_cls_forward.1} parent=51 // pred_fallthru
          _
        // Predicated region
        $region65: #{bert_entail_cls_forward.1} parent=51 // pred_check
          %p1289 = pneg %p226
        $region66: #{bert_entail_cls_forward.1} parent=51 // pred_check_branch
          %1291 = sbr.rel (%p1289) target = $region68
        $region67: #{bert_entail_cls_forward.1} parent=51 // pred_region
          %1292 = dma.done [#allocation4], 32
        $region68: #{bert_entail_cls_forward.1} parent=51 // pred_fallthru
          _
      $region52: #{bert_entail_cls_forward.1} parent=5 // pred_fallthru
        _
      %p1293 = scmp.le.s32.totalorder 2, %s15
      // Predicated region
      $region69: #{bert_entail_cls_forward.1} parent=5 // pred_check
        %p1294 = pneg %p1293
      $region70: #{bert_entail_cls_forward.1} parent=5 // pred_check_branch
        %1296 = sbr.rel (%p1294) target = $region72
      $region71: #{bert_entail_cls_forward.1} parent=5 // pred_region
        %s1297 = ssub.s32 %s15, 2
      $region72: #{bert_entail_cls_forward.1} parent=5 // pred_fallthru
        _
    $region6: #{bert_entail_cls_forward.1} parent=1 // loop_footer
      %s19 = sadd.s32 1, %s15
    $region7: #{bert_entail_cls_forward.1} parent=1 // loop_footer_branch
      %14 = sbr.rel target = $region3
    $region8: #{bert_entail_cls_forward.1} parent=1 // loop_exit
      _
    %1298 = vsyncpa [#allocation4], 1
    %s1299 = scalar_lea.sflag [#allocation4], 1
    %1300 = vsyncpa %s1299, 1

</llo_original>
